<compile_context>
chip_gen: v7x
topology: tpu7x:2x2x1
jax: 0.10.0
libtpu: 0.0.40
codegen_flags: <defaults>
</compile_context>

<pallas_src>
import jax
import jax.numpy as jnp
import numpy as np
from jax.experimental import pallas as pl
from jax.experimental.pallas import tpu as pltpu


# ----------------------------------------------------------------------------
# Fused Covariance + Mean estimator kernel (TB batch elements per grid step)
# ----------------------------------------------------------------------------
def _mvr_kernel(x_ref,        # (TB*M, K*N)   time-major rows, K shifted windows lane-concat
                wd_ref,       # (2, K*N, N)   [0]=cov diff taps, [1]=ret diff taps (stacked)
                rep_til_ref,  # (2, N, N*N)   [0]=rep: (v@rep)[i*N+j]=v[i]; [1]=til: v[j]
                sel_ref,      # (3, TB, TB*M) [0]=wq, [1]=wb, [2]=wbr block-diag time selectors
                adc_t_ref,    # (N*N, N*N)    covariance adapter weight^T
                adr_t_ref,    # (N, N)        mean adapter weight^T
                cov_ref,      # out: (TB, N*N) flattened adapted covariance
                ret_ref):     # out: (TB, N)   adapted mean return
    xw = x_ref[...]                                               # (TB*M, K*N)

    # ---- Differential (cov path): one fused aligned MXU matmul over all taps.
    r = jnp.dot(xw, wd_ref[0], preferred_element_type=jnp.float32)  # (TB*M, N)

    # ---- Quadratic E_w[r r^T] flattened to (TB, N^2) without any reshape:
    # Khatri-Rao expansion e[row, i*N+j] = r[row,i]*r[row,j], then ONE
    # block-diagonal per-batch weighted time reduction.  Rows with t >= T'
    # (batch-boundary / padded windows) carry zero selector weight.
    r_rep = jnp.dot(r, rep_til_ref[0], preferred_element_type=jnp.float32)
    r_til = jnp.dot(r, rep_til_ref[1], preferred_element_type=jnp.float32)
    e = r_rep * r_til                                             # (TB*M, N^2)
    flat_sq = jnp.dot(sel_ref[0], e,
                      preferred_element_type=jnp.float32)         # (TB, N^2)

    # ---- Barycenter mean + rank-1 correction, still flattened.
    mean = jnp.dot(sel_ref[1], r, preferred_element_type=jnp.float32)  # (TB, N)
    m_rep = jnp.dot(mean, rep_til_ref[0], preferred_element_type=jnp.float32)
    m_til = jnp.dot(mean, rep_til_ref[1], preferred_element_type=jnp.float32)
    flat_cov = flat_sq - m_rep * m_til                            # (TB, N^2)

    # ---- Covariance adapter: one (TB, N^2) @ (N^2, N^2) GEMM, full-slab store.
    # TODO(synk): for N >~ 48 on v7x (64 MiB VMEM) stream adc_t in row blocks
    # via an extra "arbitrary" grid axis instead of keeping N^4 floats resident.
    cov_ref[...] = jnp.dot(flat_cov, adc_t_ref[...],
                           preferred_element_type=jnp.float32)    # (TB, N^2)

    # ---- Mean-return estimator: reduce over time FIRST, then diff taps,
    # then adapter -- avoids materializing a second 256-row returns matrix.
    retw = jnp.dot(sel_ref[2], xw, preferred_element_type=jnp.float32)   # (TB, K*N)
    ret_pre = jnp.dot(retw, wd_ref[1], preferred_element_type=jnp.float32)  # (TB, N)
    ret_ref[...] = jnp.dot(ret_pre, adr_t_ref[...],
                           preferred_element_type=jnp.float32)    # (TB, N)


# ----------------------------------------------------------------------------
# Host-side helpers (XLA layout plumbing, all cheap)
# ----------------------------------------------------------------------------
def _default_grid_steps():
    """2 balanced steps on dual-TensorCore v7x, 1 step on single-TC v5e/v6e."""
    try:
        kind = jax.devices()[0].device_kind.lower()
    except Exception:
        return 1
    return 2 if "7" in kind else 1


def _choose_tiling(b, grid_steps):
    if grid_steps <= 1:
        return 1, b                              # single full-batch step
    # two steps: pad batch so each tile has a sublane-friendly row count
    b_pad = -(-b // (8 * grid_steps)) * (8 * grid_steps)
    return grid_steps, b_pad // grid_steps


def build_cov_ret(x, params, *, grid_steps=None):
    """Fused Covariance / Mean estimators; returns (cov (B,N,N), ret (B,N))."""
    b, n, m = x.shape
    k = params["wdiff_cov"].shape[0]
    if grid_steps is None:
        grid_steps = _default_grid_steps()
    grid_steps, tb = _choose_tiling(b, grid_steps)
    b_pad = tb * grid_steps
    if b_pad != b:
        x = jnp.concatenate([x, jnp.zeros((b_pad - b, n, m), x.dtype)], axis=0)
    tbm = tb * m
    tp = m - (k - 1)

    # Time-major row stack + lane-concat of the K shifted windows (im2col,
    # pure layout, no arithmetic).  Windows crossing a batch boundary (or the
    # zero tail) land on rows whose selector weight is exactly zero.
    x_rows = jnp.swapaxes(x, 1, 2).reshape(b_pad * m, n).astype(jnp.float32)
    x_ext = jnp.concatenate([x_rows, jnp.zeros((k - 1, n), jnp.float32)], axis=0)
    x_cat = jnp.concatenate([x_ext[tap:tap + b_pad * m] for tap in range(k)],
                            axis=1)                               # (B*M, K*N)

    # Diff taps, transposed & tap-stacked: wd_cat[tap*N + i, j] = wdiff[tap, j, i].
    def cat_taps(w):
        return jnp.transpose(w, (0, 2, 1)).reshape(k * n, n).astype(jnp.float32)
    wd = jnp.stack([cat_taps(params["wdiff_cov"]),
                    cat_taps(params["wdiff_ret"])])               # (2, K*N, N)

    rep = jnp.repeat(jnp.eye(n, dtype=jnp.float32), n, axis=1)    # (N, N^2)
    til = jnp.tile(jnp.eye(n, dtype=jnp.float32), (1, n))         # (N, N^2)
    rep_til = jnp.stack([rep, til])                               # (2, N, N^2)

    def selector(w):
        wpad = jnp.zeros((m,), jnp.float32).at[:tp].set(w.astype(jnp.float32))
        return jnp.kron(jnp.eye(tb, dtype=jnp.float32), wpad[None, :])  # (TB, TB*M)
    sel = jnp.stack([selector(params["wq"]),
                     selector(params["wb"]),
                     selector(params["wbr"])])                    # (3, TB, TB*M)

    # TODO(synk): cast x_cat / wd / rep_til / adc_t to bf16 (f32 accumulation)
    # once N grows and the adapter GEMM becomes MXU-relevant.
    adc_t = params["adc_t"].astype(jnp.float32)
    adr_t = params["adr_t"].astype(jnp.float32)

    cov_flat, ret = pl.pallas_call(
        _mvr_kernel,
        out_shape=(jax.ShapeDtypeStruct((b_pad, n * n), jnp.float32),
                   jax.ShapeDtypeStruct((b_pad, n), jnp.float32)),
        grid_spec=pltpu.PrefetchScalarGridSpec(
            num_scalar_prefetch=0,
            grid=(grid_steps,),
            in_specs=[
                pl.BlockSpec((tbm, k * n), lambda i: (i, 0)),        # x windows (streamed)
                pl.BlockSpec((2, k * n, n), lambda i: (0, 0, 0)),    # diff taps (cov|ret)
                pl.BlockSpec((2, n, n * n), lambda i: (0, 0, 0)),    # rep|til selectors
                pl.BlockSpec((3, tb, tbm), lambda i: (0, 0, 0)),     # wq|wb|wbr time selectors
                pl.BlockSpec((n * n, n * n), lambda i: (0, 0)),      # cov adapter^T
                pl.BlockSpec((n, n), lambda i: (0, 0)),              # ret adapter^T
            ],
            out_specs=(pl.BlockSpec((tb, n * n), lambda i: (i, 0)),
                       pl.BlockSpec((tb, n), lambda i: (i, 0))),
        ),
        compiler_params=pltpu.CompilerParams(
            dimension_semantics=("parallel",)),
    )(x_cat, wd, rep_til, sel, adc_t, adr_t)

    return cov_flat[:b].reshape(b, n, n), ret[:b]


def _assemble_kkt(cov, ret):
    """KKT assembly (pure layout plumbing) done in XLA, fused into solve prep."""
    b, n, _ = cov.shape
    A = jnp.zeros((b, n + 2, n + 2), jnp.float32)
    A = A.at[:, 0:n, 0:n].set(cov)
    A = A.at[:, n, 0:n].set(1.0)
    A = A.at[:, 0:n, n].set(-1.0)
    A = A.at[:, n + 1, 0:n].set(ret)
    A = A.at[:, 0:n, n + 1].set(-ret)
    return A


def min_variance_return(x, params, target, *, grid_steps=None):
    b, n, _ = x.shape
    cov, ret = build_cov_ret(x, params, grid_steps=grid_steps)
    A = _assemble_kkt(cov, ret)
    rhs = jnp.zeros((b, n + 2, 1), jnp.float32)
    rhs = rhs.at[:, n, 0].set(1.0)
    rhs = rhs.at[:, n + 1, 0].set(target)
    # TODO(synk): torch.solve (batched LU with pivoting) has no clean Pallas TPU
    # equivalent; solved with jnp.linalg.solve outside the kernel.
    sol = jnp.linalg.solve(A, rhs)
    return sol[:, 0:n]                                # (B, N, 1)


# ----------------------------------------------------------------------------
# Default-init parameters (matches the PyTorch module defaults)
# ----------------------------------------------------------------------------
def make_params(n, m, k):
    assert k >= 2, "Differential needs at least 2 taps"
    tp = m - (k - 1)
    # Default Differential init: r_t = x_t - x_{t-1}.  wdiff is (tap, out, in).
    wdiff = np.zeros((k, n, n), dtype=np.float32)
    for i in range(n):
        wdiff[k - 1, i, i] = 1.0
        wdiff[k - 2, i, i] = -1.0
    w_time = np.full((tp,), 1.0 / tp, dtype=np.float32)   # 1/T' sample weights
    # TODO(synk): eps=1e-4 regularization inside Differential/Quadratic has
    # unspecified semantics (class sources not provided); omitted here.
    return {
        "wdiff_cov": jnp.asarray(wdiff),
        "wq": jnp.asarray(w_time),
        "wb": jnp.asarray(w_time),
        "adc_t": jnp.eye(n * n, dtype=jnp.float32),
        "wdiff_ret": jnp.asarray(wdiff),
        "wbr": jnp.asarray(w_time),
        "adr_t": jnp.eye(n, dtype=jnp.float32),
    }


# ----------------------------------------------------------------------------
# Pure-JAX references
# ----------------------------------------------------------------------------
def reference_default(x, k, target):
    """Default-init module == standard (biased) covariance / mean solution."""
    b, n, m = x.shape
    r = x[:, :, k - 1:] - x[:, :, k - 2:m - 1]
    tp = r.shape[2]
    mean = jnp.mean(r, axis=2, keepdims=True)
    squared = jnp.einsum("bnt,bmt->bnm", r, r) / tp
    cov = squared - mean @ jnp.swapaxes(mean, 1, 2)
    ret = jnp.mean(r, axis=2)
    A = _assemble_kkt(cov, ret)
    rhs = jnp.zeros((b, n + 2, 1), jnp.float32)
    rhs = rhs.at[:, n, 0].set(1.0)
    rhs = rhs.at[:, n + 1, 0].set(target)
    return jnp.linalg.solve(A, rhs)[:, 0:n]


def reference_cov_ret(x, params):
    """General-weights reference for the fused Covariance / Mean estimators."""
    b, n, m = x.shape
    k = params["wdiff_cov"].shape[0]
    tp = m - (k - 1)

    def diff(w):
        out = jnp.zeros((b, n, tp), jnp.float32)
        for tap in range(k):
            out = out + jnp.einsum("oi,bit->bot", w[tap], x[:, :, tap:tap + tp])
        return out

    r = diff(params["wdiff_cov"])
    squared = jnp.einsum("bit,t,bjt->bij", r, params["wq"], r)
    mean = jnp.einsum("bit,t->bi", r, params["wb"])
    cov = squared - mean[:, :, None] * mean[:, None, :]
    cov = (cov.reshape(b, n * n) @ params["adc_t"]).reshape(b, n, n)
    r2 = diff(params["wdiff_ret"])
    ret = jnp.einsum("bit,t->bi", r2, params["wbr"]) @ params["adr_t"]
    return cov, ret


# ----------------------------------------------------------------------------
if __name__ == "__main__":
    B, N, M, K = 16, 8, 32, 3          # batch, assets, time steps, conv taps
    target = jnp.float32(0.12 / 365.0)  # default self.returns

    key = jax.random.PRNGKey(0)
    x = jax.random.normal(key, (B, N, M), dtype=jnp.float32)

    mvr = jax.jit(min_variance_return, static_argnames=("grid_steps",))
    cvr = jax.jit(build_cov_ret, static_argnames=("grid_steps",))

    # --- check 1: default-initialized module vs. standard covariance solution.
    p = make_params(N, M, K)
    out = jax.block_until_ready(mvr(x, p, target))
    ref = jax.block_until_ready(reference_default(x, K, target))
    assert out.shape == (B, N, 1), out.shape
    np.testing.assert_allclose(np.asarray(out), np.asarray(ref),
                               rtol=1e-3, atol=2e-4)

    # --- check 2: general (non-default) weights -- compare the estimator
    # outputs (cov, ret) directly, no solve-conditioning amplification.
    ks = jax.random.split(jax.random.PRNGKey(1), 7)
    p2 = dict(p)
    p2["wdiff_cov"] = p["wdiff_cov"] + 0.05 * jax.random.normal(ks[0], (K, N, N))
    p2["wdiff_ret"] = p["wdiff_ret"] + 0.05 * jax.random.normal(ks[1], (K, N, N))
    p2["wq"] = p["wq"] * (1.0 + 0.1 * jax.random.normal(ks[2], p["wq"].shape))
    p2["wb"] = p["wb"] * (1.0 + 0.1 * jax.random.normal(ks[3], p["wb"].shape))
    p2["wbr"] = p["wbr"] * (1.0 + 0.1 * jax.random.normal(ks[4], p["wbr"].shape))
    p2["adc_t"] = p["adc_t"] + 0.05 * jax.random.normal(ks[5], (N * N, N * N))
    p2["adr_t"] = p["adr_t"] + 0.05 * jax.random.normal(ks[6], (N, N))
    cov_k, ret_k = jax.block_until_ready(cvr(x, p2))
    cov_r, ret_r = jax.block_until_ready(reference_cov_ret(x, p2))
    np.testing.assert_allclose(np.asarray(cov_k), np.asarray(cov_r),
                               rtol=5e-4, atol=1e-4)
    np.testing.assert_allclose(np.asarray(ret_k), np.asarray(ret_r),
                               rtol=5e-4, atol=1e-4)

    print("KERNEL_OK")
</pallas_src>

<mosaic_0001>
module attributes {stable_mosaic.version = 11 : i64} {
  func.func @_mvr_kernel(%arg0: i32, %arg1: memref<512x24xf32, #tpu.memory_space<vmem>>, %arg2: memref<2x24x8xf32, #tpu.memory_space<vmem>>, %arg3: memref<2x8x64xf32, #tpu.memory_space<vmem>>, %arg4: memref<3x16x512xf32, #tpu.memory_space<vmem>>, %arg5: memref<64x64xf32, #tpu.memory_space<vmem>>, %arg6: memref<8x8xf32, #tpu.memory_space<vmem>>, %arg7: memref<16x64xf32, #tpu.memory_space<vmem>>, %arg8: memref<16x8xf32, #tpu.memory_space<vmem>>) attributes {dimension_semantics = [#tpu.dimension_semantics<parallel>], iteration_bounds = array<i64: 1>, scalar_prefetch = 0 : i64, scratch_operands = 0 : i64, tpu.core_type = #tpu.core_type<tc>, window_params = [{transform_indices = @transform_0, window_bounds = array<i64: 512, 24>}, {pipeline_mode = #tpu.pipeline_mode<synchronous>, transform_indices = @transform_1, window_bounds = array<i64: 2, 24, 8>}, {pipeline_mode = #tpu.pipeline_mode<synchronous>, transform_indices = @transform_2, window_bounds = array<i64: 2, 8, 64>}, {pipeline_mode = #tpu.pipeline_mode<synchronous>, transform_indices = @transform_3, window_bounds = array<i64: 3, 16, 512>}, {pipeline_mode = #tpu.pipeline_mode<synchronous>, transform_indices = @transform_4, window_bounds = array<i64: 64, 64>}, {pipeline_mode = #tpu.pipeline_mode<synchronous>, transform_indices = @transform_5, window_bounds = array<i64: 8, 8>}, {transform_indices = @transform_6, window_bounds = array<i64: 16, 64>}, {transform_indices = @transform_7, window_bounds = array<i64: 16, 8>}]} {
    %c0 = arith.constant 0 : index
    %c0_0 = arith.constant 0 : index
    %0 = vector.load %arg1[%c0, %c0_0] : memref<512x24xf32, #tpu.memory_space<vmem>>, vector<512x24xf32>
    %c0_1 = arith.constant 0 : index
    %c0_2 = arith.constant 0 : index
    %c0_3 = arith.constant 0 : index
    %1 = vector.load %arg2[%c0_1, %c0_2, %c0_3] : memref<2x24x8xf32, #tpu.memory_space<vmem>>, vector<1x24x8xf32>
    %2 = vector.shape_cast %1 : vector<1x24x8xf32> to vector<24x8xf32>
    %cst = arith.constant dense<0.000000e+00> : vector<512x8xf32>
    %3 = tpu.matmul %0, %2, %cst {dimension_numbers = #tpu.dot_dimension_numbers<[1], [0], [0], [1], [0, 0, 1, 1], [], []>} : vector<512x24xf32>, vector<24x8xf32>, vector<512x8xf32> -> vector<512x8xf32>
    %c0_4 = arith.constant 0 : index
    %c0_5 = arith.constant 0 : index
    %c0_6 = arith.constant 0 : index
    %4 = vector.load %arg3[%c0_4, %c0_5, %c0_6] : memref<2x8x64xf32, #tpu.memory_space<vmem>>, vector<1x8x64xf32>
    %5 = vector.shape_cast %4 : vector<1x8x64xf32> to vector<8x64xf32>
    %cst_7 = arith.constant dense<0.000000e+00> : vector<512x64xf32>
    %6 = tpu.matmul %3, %5, %cst_7 {dimension_numbers = #tpu.dot_dimension_numbers<[1], [0], [0], [1], [0, 0, 1, 1], [], []>} : vector<512x8xf32>, vector<8x64xf32>, vector<512x64xf32> -> vector<512x64xf32>
    %c1 = arith.constant 1 : index
    %c0_8 = arith.constant 0 : index
    %c0_9 = arith.constant 0 : index
    %7 = vector.load %arg3[%c1, %c0_8, %c0_9] : memref<2x8x64xf32, #tpu.memory_space<vmem>>, vector<1x8x64xf32>
    %8 = vector.shape_cast %7 : vector<1x8x64xf32> to vector<8x64xf32>
    %cst_10 = arith.constant dense<0.000000e+00> : vector<512x64xf32>
    %9 = tpu.matmul %3, %8, %cst_10 {dimension_numbers = #tpu.dot_dimension_numbers<[1], [0], [0], [1], [0, 0, 1, 1], [], []>} : vector<512x8xf32>, vector<8x64xf32>, vector<512x64xf32> -> vector<512x64xf32>
    %10 = arith.mulf %6, %9 : vector<512x64xf32>
    %c0_11 = arith.constant 0 : index
    %c0_12 = arith.constant 0 : index
    %c0_13 = arith.constant 0 : index
    %11 = vector.load %arg4[%c0_11, %c0_12, %c0_13] : memref<3x16x512xf32, #tpu.memory_space<vmem>>, vector<1x16x512xf32>
    %12 = vector.shape_cast %11 : vector<1x16x512xf32> to vector<16x512xf32>
    %cst_14 = arith.constant dense<0.000000e+00> : vector<16x64xf32>
    %13 = tpu.matmul %12, %10, %cst_14 {dimension_numbers = #tpu.dot_dimension_numbers<[1], [0], [0], [1], [0, 0, 1, 1], [], []>} : vector<16x512xf32>, vector<512x64xf32>, vector<16x64xf32> -> vector<16x64xf32>
    %c1_15 = arith.constant 1 : index
    %c0_16 = arith.constant 0 : index
    %c0_17 = arith.constant 0 : index
    %14 = vector.load %arg4[%c1_15, %c0_16, %c0_17] : memref<3x16x512xf32, #tpu.memory_space<vmem>>, vector<1x16x512xf32>
    %15 = vector.shape_cast %14 : vector<1x16x512xf32> to vector<16x512xf32>
    %cst_18 = arith.constant dense<0.000000e+00> : vector<16x8xf32>
    %16 = tpu.matmul %15, %3, %cst_18 {dimension_numbers = #tpu.dot_dimension_numbers<[1], [0], [0], [1], [0, 0, 1, 1], [], []>} : vector<16x512xf32>, vector<512x8xf32>, vector<16x8xf32> -> vector<16x8xf32>
    %c0_19 = arith.constant 0 : index
    %c0_20 = arith.constant 0 : index
    %c0_21 = arith.constant 0 : index
    %17 = vector.load %arg3[%c0_19, %c0_20, %c0_21] : memref<2x8x64xf32, #tpu.memory_space<vmem>>, vector<1x8x64xf32>
    %18 = vector.shape_cast %17 : vector<1x8x64xf32> to vector<8x64xf32>
    %cst_22 = arith.constant dense<0.000000e+00> : vector<16x64xf32>
    %19 = tpu.matmul %16, %18, %cst_22 {dimension_numbers = #tpu.dot_dimension_numbers<[1], [0], [0], [1], [0, 0, 1, 1], [], []>} : vector<16x8xf32>, vector<8x64xf32>, vector<16x64xf32> -> vector<16x64xf32>
    %c1_23 = arith.constant 1 : index
    %c0_24 = arith.constant 0 : index
    %c0_25 = arith.constant 0 : index
    %20 = vector.load %arg3[%c1_23, %c0_24, %c0_25] : memref<2x8x64xf32, #tpu.memory_space<vmem>>, vector<1x8x64xf32>
    %21 = vector.shape_cast %20 : vector<1x8x64xf32> to vector<8x64xf32>
    %cst_26 = arith.constant dense<0.000000e+00> : vector<16x64xf32>
    %22 = tpu.matmul %16, %21, %cst_26 {dimension_numbers = #tpu.dot_dimension_numbers<[1], [0], [0], [1], [0, 0, 1, 1], [], []>} : vector<16x8xf32>, vector<8x64xf32>, vector<16x64xf32> -> vector<16x64xf32>
    %23 = arith.mulf %19, %22 : vector<16x64xf32>
    %24 = arith.subf %13, %23 : vector<16x64xf32>
    %c0_27 = arith.constant 0 : index
    %c0_28 = arith.constant 0 : index
    %25 = vector.load %arg5[%c0_27, %c0_28] : memref<64x64xf32, #tpu.memory_space<vmem>>, vector<64x64xf32>
    %cst_29 = arith.constant dense<0.000000e+00> : vector<16x64xf32>
    %26 = tpu.matmul %24, %25, %cst_29 {dimension_numbers = #tpu.dot_dimension_numbers<[1], [0], [0], [1], [0, 0, 1, 1], [], []>} : vector<16x64xf32>, vector<64x64xf32>, vector<16x64xf32> -> vector<16x64xf32>
    %c0_30 = arith.constant 0 : index
    %c0_31 = arith.constant 0 : index
    %27 = vector.load %arg7[%c0_30, %c0_31] : memref<16x64xf32, #tpu.memory_space<vmem>>, vector<16x64xf32>
    tpu.vector_store %arg7[%c0_30, %c0_31], %26 {strides = array<i32>} : memref<16x64xf32, #tpu.memory_space<vmem>>, vector<16x64xf32>,
    %c2 = arith.constant 2 : index
    %c0_32 = arith.constant 0 : index
    %c0_33 = arith.constant 0 : index
    %28 = vector.load %arg4[%c2, %c0_32, %c0_33] : memref<3x16x512xf32, #tpu.memory_space<vmem>>, vector<1x16x512xf32>
    %29 = vector.shape_cast %28 : vector<1x16x512xf32> to vector<16x512xf32>
    %cst_34 = arith.constant dense<0.000000e+00> : vector<16x24xf32>
    %30 = tpu.matmul %29, %0, %cst_34 {dimension_numbers = #tpu.dot_dimension_numbers<[1], [0], [0], [1], [0, 0, 1, 1], [], []>} : vector<16x512xf32>, vector<512x24xf32>, vector<16x24xf32> -> vector<16x24xf32>
    %c1_35 = arith.constant 1 : index
    %c0_36 = arith.constant 0 : index
    %c0_37 = arith.constant 0 : index
    %31 = vector.load %arg2[%c1_35, %c0_36, %c0_37] : memref<2x24x8xf32, #tpu.memory_space<vmem>>, vector<1x24x8xf32>
    %32 = vector.shape_cast %31 : vector<1x24x8xf32> to vector<24x8xf32>
    %cst_38 = arith.constant dense<0.000000e+00> : vector<16x8xf32>
    %33 = tpu.matmul %30, %32, %cst_38 {dimension_numbers = #tpu.dot_dimension_numbers<[1], [0], [0], [1], [0, 0, 1, 1], [], []>} : vector<16x24xf32>, vector<24x8xf32>, vector<16x8xf32> -> vector<16x8xf32>
    %c0_39 = arith.constant 0 : index
    %c0_40 = arith.constant 0 : index
    %34 = vector.load %arg6[%c0_39, %c0_40] : memref<8x8xf32, #tpu.memory_space<vmem>>, vector<8x8xf32>
    %cst_41 = arith.constant dense<0.000000e+00> : vector<16x8xf32>
    %35 = tpu.matmul %33, %34, %cst_41 {dimension_numbers = #tpu.dot_dimension_numbers<[1], [0], [0], [1], [0, 0, 1, 1], [], []>} : vector<16x8xf32>, vector<8x8xf32>, vector<16x8xf32> -> vector<16x8xf32>
    %c0_42 = arith.constant 0 : index
    %c0_43 = arith.constant 0 : index
    %36 = vector.load %arg8[%c0_42, %c0_43] : memref<16x8xf32, #tpu.memory_space<vmem>>, vector<16x8xf32>
    tpu.vector_store %arg8[%c0_42, %c0_43], %35 {strides = array<i32>} : memref<16x8xf32, #tpu.memory_space<vmem>>, vector<16x8xf32>,
    return
  }
  func.func @transform_0(%arg0: i32) -> (i32, i32) {
    %c0_i32 = arith.constant 0 : i32
    %c0_i32_0 = arith.constant 0 : i32
    return %arg0, %c0_i32 : i32, i32
  }
  func.func @transform_1(%arg0: i32) -> (i32, i32, i32) {
    %c0_i32 = arith.constant 0 : i32
    %c0_i32_0 = arith.constant 0 : i32
    %c0_i32_1 = arith.constant 0 : i32
    %c0_i32_2 = arith.constant 0 : i32
    return %c0_i32, %c0_i32_0, %c0_i32_1 : i32, i32, i32
  }
  func.func @transform_2(%arg0: i32) -> (i32, i32, i32) {
    %c0_i32 = arith.constant 0 : i32
    %c0_i32_0 = arith.constant 0 : i32
    %c0_i32_1 = arith.constant 0 : i32
    %c0_i32_2 = arith.constant 0 : i32
    return %c0_i32, %c0_i32_0, %c0_i32_1 : i32, i32, i32
  }
  func.func @transform_3(%arg0: i32) -> (i32, i32, i32) {
    %c0_i32 = arith.constant 0 : i32
    %c0_i32_0 = arith.constant 0 : i32
    %c0_i32_1 = arith.constant 0 : i32
    %c0_i32_2 = arith.constant 0 : i32
    return %c0_i32, %c0_i32_0, %c0_i32_1 : i32, i32, i32
  }
  func.func @transform_4(%arg0: i32) -> (i32, i32) {
    %c0_i32 = arith.constant 0 : i32
    %c0_i32_0 = arith.constant 0 : i32
    %c0_i32_1 = arith.constant 0 : i32
    return %c0_i32, %c0_i32_0 : i32, i32
  }
  func.func @transform_5(%arg0: i32) -> (i32, i32) {
    %c0_i32 = arith.constant 0 : i32
    %c0_i32_0 = arith.constant 0 : i32
    %c0_i32_1 = arith.constant 0 : i32
    return %c0_i32, %c0_i32_0 : i32, i32
  }
  func.func @transform_6(%arg0: i32) -> (i32, i32) {
    %c0_i32 = arith.constant 0 : i32
    %c0_i32_0 = arith.constant 0 : i32
    return %arg0, %c0_i32 : i32, i32
  }
  func.func @transform_7(%arg0: i32) -> (i32, i32) {
    %c0_i32 = arith.constant 0 : i32
    %c0_i32_0 = arith.constant 0 : i32
    return %arg0, %c0_i32 : i32, i32
  }
}

</mosaic_0001>

<llo_original>
// kernel: custom-call.8
$region0: #{custom-call.8}
  %s0 = inlined_call_operand.vmem [shape: f32[16,10,10], index: 0, kind: input, shape index: {}]
  %s1 = inlined_call_operand.vmem [shape: f32[16,10,10], index: 1, kind: output, shape index: {0}]
  %s2 = inlined_call_operand.hbm [shape: s32[16,10], index: 2, kind: output, shape index: {1}]
  %s3 = inlined_call_operand.vmem [shape: s32[16,10], index: 3, kind: output, shape index: {2}]
  %4 = xla_tuple %s1, %s2, %s3
  $region1: #{custom-call.8} parent=0
    #allocation0 [shape = 'u8[16384]{0}', space=vmem, size = 0x4000, scoped, tag = 'operand span for operand 0']
    #allocation1 [shape = 'u8[16384]{0}', space=vmem, size = 0x4000, scoped, tag = 'operand span for operand 1']
    #allocation2 [shape = 'u8[8192]{0}', space=vmem, size = 0x2000, scoped, tag = 'operand span for operand 2']
    #allocation3 [shape = 's32[2]{0}', space=sflag, size = 0x8, scoped, tag = 'scoped memory for custom-call.8']
    #allocation4 [shape = 'u8[8192]{0}', space=vmem, size = 0x2000, scoped, tag = 'operand span for operand 3']
    %5 = vsyncpa [#allocation3], 0
    %s6 = scalar_lea.sflag [#allocation3], 1
    %7 = vsyncpa %s6, 0
    loop: start=0, step=1, limit=18
    $region2: #{custom-call.8} parent=1 // loop_pre_header
      _
    $region3: #{custom-call.8} parent=1 // loop_header
      %s9 = sphi 0, %s13
      %p10 = scmp.ge.s32.totalorder %s9, 18
      %s21 = sphi 0, %s23
      %s24 = sphi 0, %s21
      %s25 = sphi 0, %s24
      %s41 = sphi 0, %s25
      %s49 = sphi 0, %s51
      %s52 = sphi 0, %s49
      %s53 = sphi 0, %s52
      %s69 = sphi 0, %s53
    $region4: #{custom-call.8} parent=1 // loop_header_branch
      %12 = sbr.rel (%p10) target = $region8
    $region5: #{custom-call.8} parent=1 // loop_body
      %s14 = ssub.s32 %s9, 1
      %s15 = ssub.s32 %s9, 2
      %s16 = sadd.s32 %s9, 1
      %s17 = sshrl.u32 %s9, 3
      %s18 = sshrl.u32 %s16, 3
      %s19 = ssub.s32 %s17, %s18
      %p20 = scmp.eq.s32.totalorder %s19, 0
      %s22 = sadd.s32 %s21, 1
      %s23 = scalar_select %p20, %s21, %s22
      %p26 = pneg %p20
      %p27 = scmp.eq.s32.totalorder %s9, 15
      %p28 = por %p26, %p27
      %p29 = scmp.ne.s32.totalorder %s21, %s24
      %p30 = scmp.eq.s32.totalorder %s9, 0
      %p31 = por %p29, %p30
      %p32 = scmp.ne.s32.totalorder %s21, %s24
      %p33 = scmp.eq.s32.totalorder %s14, 15
      %p34 = por %p32, %p33
      %p35 = scmp.ne.s32.totalorder %s24, %s25
      %p36 = scmp.eq.s32.totalorder %s14, 0
      %p37 = por %p35, %p36
      %p38 = scmp.ne.s32.totalorder %s24, %s25
      %p39 = scmp.eq.s32.totalorder %s15, 15
      %p40 = por %p38, %p39
      %p42 = scmp.ne.s32.totalorder %s25, %s41
      %p43 = scmp.eq.s32.totalorder %s15, 0
      %p44 = por %p42, %p43
      %s45 = sshrl.u32 %s9, 3
      %s46 = sshrl.u32 %s16, 3
      %s47 = ssub.s32 %s45, %s46
      %p48 = scmp.eq.s32.totalorder %s47, 0
      %s50 = sadd.s32 %s49, 1
      %s51 = scalar_select %p48, %s49, %s50
      %p54 = pneg %p48
      %p55 = scmp.eq.s32.totalorder %s9, 15
      %p56 = por %p54, %p55
      %p57 = scmp.ne.s32.totalorder %s49, %s52
      %p58 = scmp.eq.s32.totalorder %s9, 0
      %p59 = por %p57, %p58
      %p60 = scmp.ne.s32.totalorder %s49, %s52
      %p61 = scmp.eq.s32.totalorder %s14, 15
      %p62 = por %p60, %p61
      %p63 = scmp.ne.s32.totalorder %s52, %s53
      %p64 = scmp.eq.s32.totalorder %s14, 0
      %p65 = por %p63, %p64
      %p66 = scmp.ne.s32.totalorder %s52, %s53
      %p67 = scmp.eq.s32.totalorder %s15, 15
      %p68 = por %p66, %p67
      %p70 = scmp.ne.s32.totalorder %s53, %s69
      %p71 = scmp.eq.s32.totalorder %s15, 0
      %p72 = por %p70, %p71
      %p73 = scmp.le.s32.totalorder 1, %s9
      %p74 = scmp.lt.s32.totalorder %s9, 17
      %p75 = pnand %p73, %p74
      %p76 = pneg %p75
      // Predicated region
      $region9: #{custom-call.8} parent=5 // pred_check
        _
      $region10: #{custom-call.8} parent=5 // pred_check_branch
        %78 = sbr.rel (%p75) target = $region12
      $region11: #{custom-call.8} parent=5 // pred_region
        %s79 = ssub.s32 %s9, 1
      $region12: #{custom-call.8} parent=5 // pred_fallthru
        _
      %p80 = scmp.lt.s32.totalorder %s9, 16
      // Predicated region
      $region13: #{custom-call.8} parent=5 // pred_check
        %p81 = pneg %p80
      $region14: #{custom-call.8} parent=5 // pred_check_branch
        %83 = sbr.rel (%p81) target = $region16
      $region15: #{custom-call.8} parent=5 // pred_region
        %s84 = sand.u32 %s9, 1
        %s85 = sand.u32 %s9, 1
        %s86 = smul.addr %s85, 16
        %s87 = scalar_lea.vmem [#allocation0], %s86
        %s88 = smul.addr %s9, 16
        %s89 = scalar_lea.vmem %s0, %s88
        // Predicated region
        $region17: #{custom-call.8} parent=15 // pred_check
          _
        $region18: #{custom-call.8} parent=15 // pred_check_branch
          %91 = sbr.rel (0) target = $region20
        $region19: #{custom-call.8} parent=15 // pred_region
          // Predicated region
          $region21: #{custom-call.8} parent=19 // pred_check
            _
          $region22: #{custom-call.8} parent=19 // pred_check_branch
            %93 = sbr.rel (0) target = $region24
          $region23: #{custom-call.8} parent=19 // pred_region
            loop: start=0, step=1, limit=1
            $region25: #{custom-call.8} parent=23 // loop_pre_header
              _
            $region26: #{custom-call.8} parent=23 // loop_header
              %s95 = sphi 0, %s99
              %p96 = scmp.ge.s32.totalorder %s95, 1
              %s100 = sphi %s89, %s89
              %s101 = sphi %s87, %s87
            $region27: #{custom-call.8} parent=23 // loop_header_branch
              %98 = sbr.rel (%p96) target = $region31
            $region28: #{custom-call.8} parent=23 // loop_body
              %v102 = vld [vmem:[%s100] sm:$0xff]
              %103 = vst [vmem:[%s101] sm:$0xff] %v102
              %v104 = vld [vmem:[%s100 + $0x8] sm:$0xff]
              %105 = vst [vmem:[%s101 + $0x8] sm:$0xff] %v104
            $region29: #{custom-call.8} parent=23 // loop_footer
              %s99 = sadd.s32 1, %s95
            $region30: #{custom-call.8} parent=23 // loop_footer_branch
              %94 = sbr.rel target = $region26
            $region31: #{custom-call.8} parent=23 // loop_exit
              _
          $region24: #{custom-call.8} parent=19 // pred_fallthru
            _
          // Predicated region
          $region32: #{custom-call.8} parent=19 // pred_check
            _
          $region33: #{custom-call.8} parent=19 // pred_check_branch
            %107 = sbr.rel target = $region35
          $region34: #{custom-call.8} parent=19 // pred_region
            _
          $region35: #{custom-call.8} parent=19 // pred_fallthru
            _
        $region20: #{custom-call.8} parent=15 // pred_fallthru
          _
        %108 = vnop
      $region16: #{custom-call.8} parent=5 // pred_fallthru
        _
      %p109 = scmp.le.s32.totalorder 1, %s9
      %p110 = scmp.lt.s32.totalorder %s9, 17
      %p111 = pnand %p109, %p110
      %p112 = pneg %p111
      // Predicated region
      $region36: #{custom-call.8} parent=5 // pred_check
        _
      $region37: #{custom-call.8} parent=5 // pred_check_branch
        %114 = sbr.rel (%p111) target = $region39
      $region38: #{custom-call.8} parent=5 // pred_region
        #allocation5 [shape = 's32[10,128]{1,0}', space=vmem, size = 0x2000, scoped, tag = 'scratch for permutations']
        %s115 = ssub.s32 %s9, 1
        %s116 = sand.u32 %s14, 1
        %s117 = sand.u32 %s14, 1
        %s118 = smul.addr %s117, 16
        %s119 = scalar_lea.vmem [#allocation0], %s118
        %s120 = sand.u32 %s14, 1
        %s121 = sand.u32 %s14, 1
        %s122 = smul.addr %s121, 16
        %s123 = scalar_lea.vmem [#allocation0], %s122
        %s124 = sand.u32 %s14, 1
        %s125 = sand.u32 %s14, 1
        %s126 = smul.addr %s125, 16
        %s127 = scalar_lea.vmem [#allocation1], %s126
        %p128 = pneg %p37
        %p129 = pneg %p34
        %s130 = sand.u32 %s24, 1
        %s131 = scalar_lea.sflag [#allocation3], %s130
        %s132 = sand.u32 %s24, 1
        %s133 = smul.addr %s132, 8
        %s134 = scalar_lea.vmem [#allocation2], %s133
        %p135 = pneg %p65
        %p136 = pneg %p62
        %s137 = sand.u32 %s52, 1
        %s138 = sand.u32 %s52, 1
        %s139 = smul.addr %s138, 8
        %s140 = scalar_lea.vmem [#allocation4], %s139
        %s141 = sshrl.u32 %s14, 3
        %s142 = sshrl.u32 %s14, 3
        %v143 = vld [vmem:[%s119] sm:$0xff]
        %144 = vst [vmem:[%s127] sm:$0xff] %v143
        %s145 = scalar_lea.vmem %s127, 8 [#allocation1]
        %s146 = scalar_lea.vmem %s119, 8 [#allocation0]
        %v147 = vld [vmem:[%s146] sm:$0xff]
        %148 = vst [vmem:[%s145] sm:$0xff] %v147
        %s149 = sand.u32 %s14, 7
        %s150 = scalar_lea.vmem %s134, %s149 [#allocation2]
        %s151 = sand.u32 %s14, 7
        %s152 = scalar_lea.vmem %s140, %s151 [#allocation4]
        %153 = vst [vmem:[%s150] sm:$0x1] 0
        %v154 = vlaneseq
        %v155 = vshrl.u32 %v154, 7
        %v156 = vmov %v155
        loop: start=0, step=1, limit=2
        $region40: #{custom-call.8} parent=38 // loop_pre_header
          _
        $region41: #{custom-call.8} parent=38 // loop_header
          %s158 = sphi 0, %s162
          %p159 = scmp.ge.s32.totalorder %s158, 2
        $region42: #{custom-call.8} parent=38 // loop_header_branch
          %161 = sbr.rel (%p159) target = $region46
        $region43: #{custom-call.8} parent=38 // loop_body
          %s163 = smul.addr %s158, 8
          %s164 = scalar_lea.vmem [#allocation5], %s163
          %s165 = smul.u32 %s158, 8
          %v166 = vstv %s165
          %v167 = vadd.s32 %v156, %v166
          %168 = vst [vmem:[%s164] sm:$0xff] %v167
        $region44: #{custom-call.8} parent=38 // loop_footer
          %s162 = sadd.s32 1, %s158
        $region45: #{custom-call.8} parent=38 // loop_footer_branch
          %157 = sbr.rel target = $region41
        $region46: #{custom-call.8} parent=38 // loop_exit
          _
        loop: start=0, step=1, limit=10
        $region47: #{custom-call.8} parent=38 // loop_pre_header
          _
        $region48: #{custom-call.8} parent=38 // loop_header
          %s170 = sphi 0, %s174
          %p171 = scmp.ge.s32.totalorder %s170, 10
        $region49: #{custom-call.8} parent=38 // loop_header_branch
          %173 = sbr.rel (%p171) target = $region53
        $region50: #{custom-call.8} parent=38 // loop_body
          %v175 = vstv %s170
          %v176 = vlaneseq
          %v177 = vshrl.u32 %v176, 7
          %v178 = vmov %v177
          %v179 = vld [vmem:[%s127] sm:$0xff]
          %v180 = vand.u32 2147483647, %v179
          %v182 = vstv %s170
          %vm183 = vcmp.ge.s32.totalorder %v178, %v182
          %vm184 = vcmp.lt.s32.totalorder %v178, 10
          %vm185 = vmand %vm183, %vm184
          %vm186 = vcmp.lt.f32.partialorder -inf, %v180
          %vm187 = vmand %vm185, %vm186
          %v188 = vsel %vm187, %v178, %v175
          %v189 = vsel %vm187, %v180, -inf
          %s190 = scalar_lea.vmem %s127, 8 [#allocation1]
          %v191 = vld [vmem:[%s190] sm:$0xff]
          %v192 = vand.u32 2147483647, %v191
          %v193 = vadd.s32 %v178, 8
          %v194 = vstv %s170
          %vm195 = vcmp.ge.s32.totalorder %v193, %v194
          %vm196 = vcmp.lt.s32.totalorder %v193, 10
          %vm197 = vmand %vm195, %vm196
          %vm198 = vcmp.lt.f32.partialorder %v189, %v192
          %vm199 = vmand %vm197, %vm198
          %v200 = vsel %vm199, %v193, %v188
          %v201 = vsel %vm199, %v192, %v189
          %v202 = vrot.slane %v201, 1
          %v203 = vrot.slane %v200, 1
          %vm204 = vcmp.ge.f32.partialorder %v202, %v201
          %v205 = vsel %vm204, %v202, %v201
          %v206 = vsel %vm204, %v203, %v200
          %v207 = vrot.slane %v202, 1
          %v208 = vrot.slane %v203, 1
          %vm209 = vcmp.ge.f32.partialorder %v207, %v205
          %v210 = vsel %vm209, %v207, %v205
          %v211 = vsel %vm209, %v208, %v206
          %v212 = vrot.slane %v207, 1
          %v213 = vrot.slane %v208, 1
          %vm214 = vcmp.ge.f32.partialorder %v212, %v210
          %v215 = vsel %vm214, %v212, %v210
          %v216 = vsel %vm214, %v213, %v211
          %v217 = vrot.slane %v212, 1
          %v218 = vrot.slane %v213, 1
          %vm219 = vcmp.ge.f32.partialorder %v217, %v215
          %v220 = vsel %vm219, %v217, %v215
          %v221 = vsel %vm219, %v218, %v216
          %v222 = vrot.slane %v217, 1
          %v223 = vrot.slane %v218, 1
          %vm224 = vcmp.ge.f32.partialorder %v222, %v220
          %v225 = vsel %vm224, %v222, %v220
          %v226 = vsel %vm224, %v223, %v221
          %v227 = vrot.slane %v222, 1
          %v228 = vrot.slane %v223, 1
          %vm229 = vcmp.ge.f32.partialorder %v227, %v225
          %v230 = vsel %vm229, %v227, %v225
          %v231 = vsel %vm229, %v228, %v226
          %v232 = vrot.slane %v227, 1
          %v233 = vrot.slane %v228, 1
          %vm234 = vcmp.ge.f32.partialorder %v232, %v230
          %v235 = vsel %vm234, %v232, %v230
          %v236 = vsel %vm234, %v233, %v231
          %s237 = ssub.s32 128, %s170
          %238 = vrot.lane.b32.xlu0 %v236, %s237
          %v239 = vpop.permute.xlu0 %238
          %s240 = vtos %v239
          %v241 = vstv %s170
          %v242 = vlaneseq
          %v243 = vand.u32 %v242, 127
          %vm244 = vcmp.eq.s32.totalorder %v243, %v241
          %v245 = vstv %s240
          %v246 = vld [vmem:[%s150] ss:$0 sm:$0xff]
          %v247 = vsel %vm244, %v245, %v246
          %248 = vst [vmem:[%s150] sm:$0x1] %v247
          %s249 = scalar_lea.vmem %s127, %s170 [#allocation1]
          %s250 = scalar_lea.vmem %s127, %s240 [#allocation1]
          %v251 = vld [vmem:[%s249] ss:$0 sm:$0xff]
          %v252 = vld [vmem:[%s250] ss:$0 sm:$0xff]
          %253 = vst [vmem:[%s250] sm:$0x1] %v251
          %254 = vst [vmem:[%s249] sm:$0x1] %v252
          %s255 = scalar_lea.vmem [#allocation5], %s170
          %s256 = scalar_lea.vmem [#allocation5], %s240
          %v257 = vld [vmem:[%s255] ss:$0 sm:$0xff]
          %v258 = vld [vmem:[%s256] ss:$0 sm:$0xff]
          %259 = vst [vmem:[%s256] sm:$0x1] %v257
          %260 = vst [vmem:[%s255] sm:$0x1] %v258
          %vm261 = vcmp.ne.f32.partialorder %v252, 0.0
          %vm262 = vmand %vm244, %vm261
          %v263 = vsel %vm262, %v252, 1.0
          %v264 = vlaneseq
          %v265 = vand.u32 %v264, 127
          %v266 = vstv %s170
          %vm267 = vcmp.gt.s32.totalorder %v265, %v266
          %v268 = vsel %vm267, %v252, 0.0
          %v269 = vlaneseq
          %v270 = vshrl.u32 %v269, 7
          %v271 = vmov %v270
          %v272 = vld [vmem:[%s127] sm:$0xff]
          %v274 = vstv %s170
          %vm275 = vcmp.gt.s32.totalorder %v271, %v274
          %v276 = vsel %vm275, %v263, 1.0
          %v277 = vrcp.pop %v276
          %v278 = vmul.f32 %v272, %v277
          %vm279 = vmand %vm275, %vm244
          %v280 = vsel %vm279, %v278, 0.0
          %281 = vadd.xlane.f32.xlu0 %v280
          %v282 = vpop.xlane.xlu0 %281
          %v283 = vmul.f32 %v282, %v268
          %v284 = vsub.f32 %v278, %v283
          %285 = vst [vmem:[%s127] sm:$0xff] %v284
          %s286 = scalar_lea.vmem %s127, 8 [#allocation1]
          %v287 = vld [vmem:[%s286] sm:$0xff]
          %v288 = vadd.s32 %v271, 8
          %v289 = vstv %s170
          %vm290 = vcmp.gt.s32.totalorder %v288, %v289
          %v291 = vsel %vm290, %v263, 1.0
          %v292 = vrcp.pop %v291
          %v293 = vmul.f32 %v287, %v292
          %vm294 = vmand %vm290, %vm244
          %v295 = vsel %vm294, %v293, 0.0
          %296 = vadd.xlane.f32.xlu0 %v295
          %v297 = vpop.xlane.xlu0 %296
          %v298 = vmul.f32 %v297, %v268
          %v299 = vsub.f32 %v293, %v298
          %300 = vst [vmem:[%s286] sm:$0xff] %v299
        $region51: #{custom-call.8} parent=38 // loop_footer
          %s174 = sadd.s32 1, %s170
        $region52: #{custom-call.8} parent=38 // loop_footer_branch
          %169 = sbr.rel target = $region48
        $region53: #{custom-call.8} parent=38 // loop_exit
          _
        %v301 = vld [vmem:[#allocation5] sm:$0xff]
        %s302 = scalar_lea.vmem [#allocation5], 8
        %v303 = vld [vmem:[%s302] sm:$0xff]
        %s304 = scalar_lea.vmem [#allocation5], 16
        %s305 = scalar_lea.vmem [#allocation5], 24
        %s306 = scalar_lea.vmem [#allocation5], 32
        %s307 = scalar_lea.vmem [#allocation5], 40
        %s308 = scalar_lea.vmem [#allocation5], 48
        %s309 = scalar_lea.vmem [#allocation5], 56
        %s310 = scalar_lea.vmem [#allocation5], 64
        %s311 = scalar_lea.vmem [#allocation5], 72
        %s312 = scalar_lea.vmem [#allocation5], 80
        %s313 = scalar_lea.vmem [#allocation5], 88
        %s314 = scalar_lea.vmem [#allocation5], 96
        %s315 = scalar_lea.vmem [#allocation5], 104
        %s316 = scalar_lea.vmem [#allocation5], 112
        %s317 = scalar_lea.vmem [#allocation5], 120
        %318 = vxpose.xlu0.b32.start [1/16] %v301, 128
        %319 = vxpose.xlu0.b32.cont [2/16] %v303, 128
        %320 = vxpose.xlu0.b32.cont [3/16] 0, 128
        %321 = vxpose.xlu0.b32.cont [4/16] 0, 128
        %322 = vxpose.xlu0.b32.cont [5/16] 0, 128
        %323 = vxpose.xlu0.b32.cont [6/16] 0, 128
        %324 = vxpose.xlu0.b32.cont [7/16] 0, 128
        %325 = vxpose.xlu0.b32.cont [8/16] 0, 128
        %326 = vxpose.xlu0.b32.cont [9/16] 0, 128
        %327 = vxpose.xlu0.b32.cont [10/16] 0, 128
        %328 = vxpose.xlu0.b32.cont [11/16] 0, 128
        %329 = vxpose.xlu0.b32.cont [12/16] 0, 128
        %330 = vxpose.xlu0.b32.cont [13/16] 0, 128
        %331 = vxpose.xlu0.b32.cont [14/16] 0, 128
        %332 = vxpose.xlu0.b32.cont [15/16] 0, 128
        %333 = vxpose.xlu0.b32.end [16/16] 0, 128
        %v334 = vpop.trf.xlu0
        %v335 = vpop.trf.xlu0
        %v336 = vpop.trf.xlu0
        %v337 = vpop.trf.xlu0
        %v338 = vpop.trf.xlu0
        %v339 = vpop.trf.xlu0
        %v340 = vpop.trf.xlu0
        %v341 = vpop.trf.xlu0
        %v342 = vpop.trf.xlu0
        %v343 = vpop.trf.xlu0
        %v344 = vpop.trf.xlu0
        %v345 = vpop.trf.xlu0
        %v346 = vpop.trf.xlu0
        %v347 = vpop.trf.xlu0
        %v348 = vpop.trf.xlu0
        %v349 = vpop.trf.xlu0
        %350 = vst [vmem:[%s152] sm:$0x1] %v334
        %s351 = sand.u32 %s14, 1
        %s352 = sand.u32 %s14, 1
        %s353 = smul.addr %s352, 16
        %s354 = scalar_lea.vmem [#allocation1], %s353
        %s355 = sand.u32 %s24, 1
        %s356 = scalar_lea.sflag [#allocation3], %s355
        %s357 = sand.u32 %s24, 1
        %s358 = smul.addr %s357, 8
        %s359 = scalar_lea.vmem [#allocation2], %s358
        %s360 = sand.u32 %s52, 1
        %s361 = sand.u32 %s52, 1
        %s362 = smul.addr %s361, 8
        %s363 = scalar_lea.vmem [#allocation4], %s362
        %s364 = smul.addr %s14, 16
        %s365 = scalar_lea.vmem %s1, %s364
        // Predicated region
        $region54: #{custom-call.8} parent=38 // pred_check
          _
        $region55: #{custom-call.8} parent=38 // pred_check_branch
          %367 = sbr.rel (0) target = $region57
        $region56: #{custom-call.8} parent=38 // pred_region
          // Predicated region
          $region58: #{custom-call.8} parent=56 // pred_check
            _
          $region59: #{custom-call.8} parent=56 // pred_check_branch
            %369 = sbr.rel (0) target = $region61
          $region60: #{custom-call.8} parent=56 // pred_region
            loop: start=0, step=1, limit=1
            $region62: #{custom-call.8} parent=60 // loop_pre_header
              _
            $region63: #{custom-call.8} parent=60 // loop_header
              %s371 = sphi 0, %s375
              %p372 = scmp.ge.s32.totalorder %s371, 1
              %s376 = sphi %s354, %s354
              %s377 = sphi %s365, %s365
            $region64: #{custom-call.8} parent=60 // loop_header_branch
              %374 = sbr.rel (%p372) target = $region68
            $region65: #{custom-call.8} parent=60 // loop_body
              %v378 = vld [vmem:[%s376] sm:$0xff]
              %379 = vst [vmem:[%s377] sm:$0xff] %v378
              %v380 = vld [vmem:[%s376 + $0x8] sm:$0xff]
              %381 = vst [vmem:[%s377 + $0x8] sm:$0xff] %v380
            $region66: #{custom-call.8} parent=60 // loop_footer
              %s375 = sadd.s32 1, %s371
            $region67: #{custom-call.8} parent=60 // loop_footer_branch
              %370 = sbr.rel target = $region63
            $region68: #{custom-call.8} parent=60 // loop_exit
              _
          $region61: #{custom-call.8} parent=56 // pred_fallthru
            _
          // Predicated region
          $region69: #{custom-call.8} parent=56 // pred_check
            _
          $region70: #{custom-call.8} parent=56 // pred_check_branch
            %383 = sbr.rel target = $region72
          $region71: #{custom-call.8} parent=56 // pred_region
            _
          $region72: #{custom-call.8} parent=56 // pred_fallthru
            _
        $region57: #{custom-call.8} parent=38 // pred_fallthru
          _
        %384 = vnop
        // Predicated region
        $region73: #{custom-call.8} parent=38 // pred_check
          %p385 = pneg %p34
        $region74: #{custom-call.8} parent=38 // pred_check_branch
          %387 = sbr.rel (%p385) target = $region76
        $region75: #{custom-call.8} parent=38 // pred_region
          %s388 = sshrl.u32 %s14, 3
          %s390 = ssub.s32 128, 128
          %391 = vsyncadd %s356, %s390
          %s392 = smul.addr %s388, 128
          %s393 = scalar_lea.hbm %s2, %s392
          %s395 = sshll.u32 %s359, 4
          %s396 = int_to_ptr.vmem [resolvable:$true] %s395
          %398 = dma.vmem_to_hbm [thread:$0]  %s396, 128, %s393, %s356
        $region76: #{custom-call.8} parent=38 // pred_fallthru
          _
        // Predicated region
        $region77: #{custom-call.8} parent=38 // pred_check
          %p399 = pneg %p62
        $region78: #{custom-call.8} parent=38 // pred_check_branch
          %401 = sbr.rel (%p399) target = $region80
        $region79: #{custom-call.8} parent=38 // pred_region
          %s402 = sshrl.u32 %s14, 3
          %s403 = smul.addr %s402, 8
          %s404 = scalar_lea.vmem %s3, %s403
          // Predicated region
          $region81: #{custom-call.8} parent=79 // pred_check
            _
          $region82: #{custom-call.8} parent=79 // pred_check_branch
            %406 = sbr.rel (0) target = $region84
          $region83: #{custom-call.8} parent=79 // pred_region
            // Predicated region
            $region85: #{custom-call.8} parent=83 // pred_check
              _
            $region86: #{custom-call.8} parent=83 // pred_check_branch
              %408 = sbr.rel (0) target = $region88
            $region87: #{custom-call.8} parent=83 // pred_region
              // Predicated region
              $region100: #{custom-call.8} parent=87 // pred_check
                _
              $region101: #{custom-call.8} parent=87 // pred_check_branch
                %423 = sbr.rel (0) target = $region103
              $region102: #{custom-call.8} parent=87 // pred_region
                loop: start=0, step=1, limit=1
                $region104: #{custom-call.8} parent=102 // loop_pre_header
                  _
                $region105: #{custom-call.8} parent=102 // loop_header
                  %s425 = sphi 0, %s429
                  %p426 = scmp.ge.s32.totalorder %s425, 1
                  %s430 = sphi %s363, %s363
                  %s431 = sphi %s404, %s404
                $region106: #{custom-call.8} parent=102 // loop_header_branch
                  %428 = sbr.rel (%p426) target = $region110
                $region107: #{custom-call.8} parent=102 // loop_body
                  %v432 = vld [vmem:[%s430] sm:$0xff]
                  %433 = vst [vmem:[%s431] sm:$0xff] %v432
                $region108: #{custom-call.8} parent=102 // loop_footer
                  %s429 = sadd.s32 1, %s425
                $region109: #{custom-call.8} parent=102 // loop_footer_branch
                  %424 = sbr.rel target = $region105
                $region110: #{custom-call.8} parent=102 // loop_exit
                  _
              $region103: #{custom-call.8} parent=87 // pred_fallthru
                _
              // Predicated region
              $region111: #{custom-call.8} parent=87 // pred_check
                _
              $region112: #{custom-call.8} parent=87 // pred_check_branch
                %435 = sbr.rel target = $region114
              $region113: #{custom-call.8} parent=87 // pred_region
                _
              $region114: #{custom-call.8} parent=87 // pred_fallthru
                _
            $region88: #{custom-call.8} parent=83 // pred_fallthru
              _
            // Predicated region
            $region89: #{custom-call.8} parent=83 // pred_check
              _
            $region90: #{custom-call.8} parent=83 // pred_check_branch
              %410 = sbr.rel target = $region92
            $region91: #{custom-call.8} parent=83 // pred_region
              loop: start=0, step=1, limit=1
              $region93: #{custom-call.8} parent=91 // loop_pre_header
                _
              $region94: #{custom-call.8} parent=91 // loop_header
                %s413 = sphi 0, %s417
                %p414 = scmp.ge.s32.totalorder %s413, 1
                %s418 = sphi %s363, %s363
                %s419 = sphi %s404, %s404
              $region95: #{custom-call.8} parent=91 // loop_header_branch
                %416 = sbr.rel (%p414) target = $region99
              $region96: #{custom-call.8} parent=91 // loop_body
                %v420 = vld [vmem:[%s418] sm:$0xff]
                %421 = vst [vmem:[%s419] sm:$0xff] %v420
              $region97: #{custom-call.8} parent=91 // loop_footer
                %s417 = sadd.s32 1, %s413
              $region98: #{custom-call.8} parent=91 // loop_footer_branch
                %412 = sbr.rel target = $region94
              $region99: #{custom-call.8} parent=91 // loop_exit
                _
            $region92: #{custom-call.8} parent=83 // pred_fallthru
              _
          $region84: #{custom-call.8} parent=79 // pred_fallthru
            _
          %436 = vnop
        $region80: #{custom-call.8} parent=38 // pred_fallthru
          _
      $region39: #{custom-call.8} parent=5 // pred_fallthru
        _
      %p437 = scmp.le.s32.totalorder 2, %s9
      // Predicated region
      $region115: #{custom-call.8} parent=5 // pred_check
        %p438 = pneg %p437
      $region116: #{custom-call.8} parent=5 // pred_check_branch
        %440 = sbr.rel (%p438) target = $region118
      $region117: #{custom-call.8} parent=5 // pred_region
        %s441 = ssub.s32 %s9, 2
        %s442 = sand.u32 %s15, 1
        %s443 = sand.u32 %s15, 1
        %s444 = smul.addr %s443, 16
        %s445 = scalar_lea.vmem [#allocation1], %s444
        // Predicated region
        $region119: #{custom-call.8} parent=117 // pred_check
          %p446 = pneg %p40
        $region120: #{custom-call.8} parent=117 // pred_check_branch
          %448 = sbr.rel (%p446) target = $region122
        $region121: #{custom-call.8} parent=117 // pred_region
          %s449 = sand.u32 %s25, 1
          %s450 = scalar_lea.sflag [#allocation3], %s449
          %s451 = sand.u32 %s25, 1
          %s452 = smul.addr %s451, 8
          %s453 = scalar_lea.vmem [#allocation2], %s452
          %454 = dma.done %s450, 128
        $region122: #{custom-call.8} parent=117 // pred_fallthru
          _
        // Predicated region
        $region123: #{custom-call.8} parent=117 // pred_check
          %p455 = pneg %p68
        $region124: #{custom-call.8} parent=117 // pred_check_branch
          %457 = sbr.rel (%p455) target = $region126
        $region125: #{custom-call.8} parent=117 // pred_region
          %s458 = sand.u32 %s53, 1
          %s459 = sand.u32 %s53, 1
          %s460 = smul.addr %s459, 8
          %s461 = scalar_lea.vmem [#allocation4], %s460
        $region126: #{custom-call.8} parent=117 // pred_fallthru
          _
      $region118: #{custom-call.8} parent=5 // pred_fallthru
        _
    $region6: #{custom-call.8} parent=1 // loop_footer
      %s13 = sadd.s32 1, %s9
    $region7: #{custom-call.8} parent=1 // loop_footer_branch
      %8 = sbr.rel target = $region3
    $region8: #{custom-call.8} parent=1 // loop_exit
      _
    %462 = vsyncpa [#allocation3], 1
    %s463 = scalar_lea.sflag [#allocation3], 1
    %464 = vsyncpa %s463, 1

// kernel: custom-call.10
$region0: #{custom-call.10}
  %s0 = inlined_call_operand.vmem [shape: f32[16,1,10,10], index: 0, kind: input, shape index: {}]
  %s1 = inlined_call_operand.vmem [shape: f32[16,1,10,10], index: 1, kind: output, shape index: {}]
  $region1: #{custom-call.10} parent=0
    #allocation0 [shape = 'u8[16384]{0}', space=vmem, size = 0x4000, scoped, tag = 'operand span for operand 0']
    #allocation1 [shape = 'u8[16384]{0}', space=vmem, size = 0x4000, scoped, tag = 'operand span for operand 1']
    loop: start=0, step=1, limit=18
    $region2: #{custom-call.10} parent=1 // loop_pre_header
      _
    $region3: #{custom-call.10} parent=1 // loop_header
      %s3 = sphi 0, %s7
      %p4 = scmp.ge.s32.totalorder %s3, 18
      %s10 = sphi 0, %s36
      %s11 = sphi 0, %s32
      %s12 = sphi 0, %s28
      %s13 = sphi 0, %s24
      %s14 = sphi 0, %s10
      %s15 = sphi 0, %s11
      %s16 = sphi 0, %s12
      %s17 = sphi 0, %s13
      %s18 = sphi 0, %s14
      %s19 = sphi 0, %s15
      %s20 = sphi 0, %s16
      %s21 = sphi 0, %s17
    $region4: #{custom-call.10} parent=1 // loop_header_branch
      %6 = sbr.rel (%p4) target = $region8
    $region5: #{custom-call.10} parent=1 // loop_body
      %s8 = ssub.s32 %s3, 1
      %s9 = ssub.s32 %s3, 2
      %s22 = sadd.s32 1, %s13
      %p23 = scmp.ge.s32.totalorder %s22, 1
      %s24 = scalar_select %p23, 0, %s22
      %s25 = sadd.s32 1, %s12
      %s26 = scalar_select %p23, %s25, %s12
      %p27 = scmp.ge.s32.totalorder %s26, 1
      %s28 = scalar_select %p27, 0, %s26
      %s29 = sadd.s32 1, %s11
      %s30 = scalar_select %p27, %s29, %s11
      %p31 = scmp.ge.s32.totalorder %s30, 1
      %s32 = scalar_select %p31, 0, %s30
      %s33 = sadd.s32 1, %s10
      %s34 = scalar_select %p31, %s33, %s10
      %p35 = scmp.ge.s32.totalorder %s34, 16
      %s36 = scalar_select %p35, 0, %s34
      %p37 = scmp.le.s32.totalorder 1, %s3
      %p38 = scmp.lt.s32.totalorder %s3, 17
      %p39 = pnand %p37, %p38
      %p40 = pneg %p39
      // Predicated region
      $region9: #{custom-call.10} parent=5 // pred_check
        _
      $region10: #{custom-call.10} parent=5 // pred_check_branch
        %42 = sbr.rel (%p39) target = $region12
      $region11: #{custom-call.10} parent=5 // pred_region
        %s43 = ssub.s32 %s3, 1
      $region12: #{custom-call.10} parent=5 // pred_fallthru
        _
      %p44 = scmp.lt.s32.totalorder %s3, 16
      // Predicated region
      $region13: #{custom-call.10} parent=5 // pred_check
        %p45 = pneg %p44
      $region14: #{custom-call.10} parent=5 // pred_check_branch
        %47 = sbr.rel (%p45) target = $region16
      $region15: #{custom-call.10} parent=5 // pred_region
        %s48 = sand.u32 %s3, 1
        %s49 = sand.u32 %s3, 1
        %s50 = smul.addr %s49, 16
        %s51 = scalar_lea.vmem [#allocation0], %s50
        %s52 = sadd.s32 %s13, %s12
        %s53 = smul.addr %s11, 2
        %s54 = sadd.s32 %s52, %s53
        %s55 = smul.addr %s10, 2
        %s56 = sadd.s32 %s54, %s55
        %s57 = smul.addr %s56, 8
        %s58 = scalar_lea.vmem %s0, %s57
        // Predicated region
        $region17: #{custom-call.10} parent=15 // pred_check
          _
        $region18: #{custom-call.10} parent=15 // pred_check_branch
          %60 = sbr.rel (0) target = $region20
        $region19: #{custom-call.10} parent=15 // pred_region
          // Predicated region
          $region21: #{custom-call.10} parent=19 // pred_check
            _
          $region22: #{custom-call.10} parent=19 // pred_check_branch
            %62 = sbr.rel (0) target = $region24
          $region23: #{custom-call.10} parent=19 // pred_region
            // Predicated region
            $region36: #{custom-call.10} parent=23 // pred_check
              _
            $region37: #{custom-call.10} parent=23 // pred_check_branch
              %79 = sbr.rel (0) target = $region39
            $region38: #{custom-call.10} parent=23 // pred_region
              loop: start=0, step=1, limit=1
              $region40: #{custom-call.10} parent=38 // loop_pre_header
                _
              $region41: #{custom-call.10} parent=38 // loop_header
                %s81 = sphi 0, %s85
                %p82 = scmp.ge.s32.totalorder %s81, 1
                %s86 = sphi %s58, %s58
                %s87 = sphi %s51, %s51
              $region42: #{custom-call.10} parent=38 // loop_header_branch
                %84 = sbr.rel (%p82) target = $region46
              $region43: #{custom-call.10} parent=38 // loop_body
                %v88 = vld [vmem:[%s86] sm:$0xff]
                %89 = vst [vmem:[%s87] sm:$0xff] %v88
                %v90 = vld [vmem:[%s86 + $0x8] sm:$0xff]
                %91 = vst [vmem:[%s87 + $0x8] sm:$0xff] %v90
              $region44: #{custom-call.10} parent=38 // loop_footer
                %s85 = sadd.s32 1, %s81
              $region45: #{custom-call.10} parent=38 // loop_footer_branch
                %80 = sbr.rel target = $region41
              $region46: #{custom-call.10} parent=38 // loop_exit
                _
            $region39: #{custom-call.10} parent=23 // pred_fallthru
              _
            // Predicated region
            $region47: #{custom-call.10} parent=23 // pred_check
              _
            $region48: #{custom-call.10} parent=23 // pred_check_branch
              %93 = sbr.rel target = $region50
            $region49: #{custom-call.10} parent=23 // pred_region
              _
            $region50: #{custom-call.10} parent=23 // pred_fallthru
              _
          $region24: #{custom-call.10} parent=19 // pred_fallthru
            _
          // Predicated region
          $region25: #{custom-call.10} parent=19 // pred_check
            _
          $region26: #{custom-call.10} parent=19 // pred_check_branch
            %64 = sbr.rel target = $region28
          $region27: #{custom-call.10} parent=19 // pred_region
            loop: start=0, step=1, limit=1
            $region29: #{custom-call.10} parent=27 // loop_pre_header
              _
            $region30: #{custom-call.10} parent=27 // loop_header
              %s67 = sphi 0, %s71
              %p68 = scmp.ge.s32.totalorder %s67, 1
              %s72 = sphi %s58, %s58
              %s73 = sphi %s51, %s51
            $region31: #{custom-call.10} parent=27 // loop_header_branch
              %70 = sbr.rel (%p68) target = $region35
            $region32: #{custom-call.10} parent=27 // loop_body
              %v74 = vld [vmem:[%s72] sm:$0xff]
              %75 = vst [vmem:[%s73] sm:$0xff] %v74
              %v76 = vld [vmem:[%s72 + $0x8] sm:$0xff]
              %77 = vst [vmem:[%s73 + $0x8] sm:$0xff] %v76
            $region33: #{custom-call.10} parent=27 // loop_footer
              %s71 = sadd.s32 1, %s67
            $region34: #{custom-call.10} parent=27 // loop_footer_branch
              %66 = sbr.rel target = $region30
            $region35: #{custom-call.10} parent=27 // loop_exit
              _
          $region28: #{custom-call.10} parent=19 // pred_fallthru
            _
        $region20: #{custom-call.10} parent=15 // pred_fallthru
          _
        %94 = vnop
      $region16: #{custom-call.10} parent=5 // pred_fallthru
        _
      %p95 = scmp.le.s32.totalorder 1, %s3
      %p96 = scmp.lt.s32.totalorder %s3, 17
      %p97 = pnand %p95, %p96
      %p98 = pneg %p97
      // Predicated region
      $region51: #{custom-call.10} parent=5 // pred_check
        _
      $region52: #{custom-call.10} parent=5 // pred_check_branch
        %100 = sbr.rel (%p97) target = $region54
      $region53: #{custom-call.10} parent=5 // pred_region
        #allocation2 [shape = 'f32[10,10]{1,0}', space=vmem, size = 0x2000, scoped, tag = 'rescaled input a']
        %s101 = ssub.s32 %s3, 1
        %s102 = sand.u32 %s8, 1
        %s103 = sand.u32 %s8, 1
        %s104 = smul.addr %s103, 16
        %s105 = scalar_lea.vmem [#allocation0], %s104
        %s106 = sand.u32 %s8, 1
        %s107 = sand.u32 %s8, 1
        %s108 = smul.addr %s107, 16
        %s109 = scalar_lea.vmem [#allocation0], %s108
        %s110 = sand.u32 %s8, 1
        %s111 = sand.u32 %s8, 1
        %s112 = smul.addr %s111, 16
        %s113 = scalar_lea.vmem [#allocation1], %s112
        %v114 = vlaneseq
        %v115 = vand.u32 %v114, 127
        %vm116 = vcmp.lt.s32.totalorder %v115, 10
        %v117 = vlaneseq
        %v118 = vshrl.u32 %v117, 7
        %vm120 = vcmp.eq.s32.totalorder %v118, %v115
        %v121 = vld [vmem:[%s105] sm:$0xff]
        %v122 = vsel %vm120, %v121, 0.0
        %123 = vadd.xlane.f32.xlu0 %v122
        %v124 = vpop.xlane.xlu0 %123
        %vm125 = vcmp.ge.s32.totalorder %v118, %v115
        %vm126 = vmand %vm125, %vm116
        %v127 = vsel %vm126, %v121, 0.0
        %v128 = vrcp.pop %v124
        %v129 = vmul.f32 %v127, %v128
        %130 = vst [vmem:[#allocation2] sm:$0xff] %v129
        %s131 = scalar_lea.vmem %s105, 8 [#allocation0]
        %s132 = scalar_lea.vmem [#allocation2], 8
        %v133 = vlaneseq
        %v134 = vshrl.u32 %v133, 7
        %v135 = vadd.s32 %v134, 8
        %vm136 = vcmp.eq.s32.totalorder %v135, %v115
        %v137 = vld [vmem:[%s131] sm:$0xff]
        %v138 = vsel %vm136, %v137, 0.0
        %139 = vadd.xlane.f32.xlu0 %v138
        %v140 = vpop.xlane.xlu0 %139
        %vm141 = vcmp.ge.s32.totalorder %v135, %v115
        %vm142 = vmand %vm141, %vm116
        %v143 = vsel %vm142, %v137, 0.0
        %v144 = vrcp.pop %v140
        %v145 = vmul.f32 %v143, %v144
        %146 = vst [vmem:[%s132] sm:$0xff] %v145
        %v147 = vlaneseq
        %v148 = vand.u32 %v147, 127
        %v149 = vlaneseq
        %v150 = vshrl.u32 %v149, 7
        %vm152 = vcmp.eq.s32.totalorder %v148, %v150
        %v153 = vlaneseq
        %v154 = vand.u32 %v153, 127
        %vm155 = vcmp.eq.s32.totalorder %v154, 0
        %v156 = vsel %vm155, 1.0, -1.0
        %v157 = vsel %vm152, %v156, 0.0
        %v158 = vlaneseq
        %v159 = vand.u32 %v158, 127
        %v160 = vlaneseq
        %v161 = vshrl.u32 %v160, 7
        %v162 = vadd.s32 %v161, 8
        %vm163 = vcmp.eq.s32.totalorder %v159, %v162
        %v164 = vsel %vm163, -1.0, 0.0
        %s165 = scalar_lea.vmem [#allocation2], 1
        %v166 = vld [vmem:[%s165] ss:$0 sm:$0xff]
        %v167 = vxor.u32 %v166, 2147483648
        %v168 = vlaneseq
        %v169 = vand.u32 %v168, 127
        %vm170 = vcmp.eq.s32.totalorder %v169, 1
        %v171 = vmul.f32 %v167, %v157
        %172 = vadd.xlane.f32.xlu0 %v171
        %v173 = vpop.xlane.xlu0 %172
        %v174 = vsel %vm170, %v173, %v157
        %s175 = scalar_lea.vmem [#allocation2], 2
        %v176 = vld [vmem:[%s175] ss:$0 sm:$0xff]
        %v177 = vxor.u32 %v176, 2147483648
        %v178 = vlaneseq
        %v179 = vand.u32 %v178, 127
        %vm180 = vcmp.eq.s32.totalorder %v179, 2
        %v181 = vmul.f32 %v177, %v174
        %182 = vadd.xlane.f32.xlu0 %v181
        %v183 = vpop.xlane.xlu0 %182
        %v184 = vsel %vm180, %v183, %v174
        %s185 = scalar_lea.vmem [#allocation2], 3
        %v186 = vld [vmem:[%s185] ss:$0 sm:$0xff]
        %v187 = vxor.u32 %v186, 2147483648
        %v188 = vlaneseq
        %v189 = vand.u32 %v188, 127
        %vm190 = vcmp.eq.s32.totalorder %v189, 3
        %v191 = vmul.f32 %v187, %v184
        %192 = vadd.xlane.f32.xlu0 %v191
        %v193 = vpop.xlane.xlu0 %192
        %v194 = vsel %vm190, %v193, %v184
        %s195 = scalar_lea.vmem [#allocation2], 4
        %v196 = vld [vmem:[%s195] ss:$0 sm:$0xff]
        %v197 = vxor.u32 %v196, 2147483648
        %v198 = vlaneseq
        %v199 = vand.u32 %v198, 127
        %vm200 = vcmp.eq.s32.totalorder %v199, 4
        %v201 = vmul.f32 %v197, %v194
        %202 = vadd.xlane.f32.xlu0 %v201
        %v203 = vpop.xlane.xlu0 %202
        %v204 = vsel %vm200, %v203, %v194
        %s205 = scalar_lea.vmem [#allocation2], 5
        %v206 = vld [vmem:[%s205] ss:$0 sm:$0xff]
        %v207 = vxor.u32 %v206, 2147483648
        %v208 = vlaneseq
        %v209 = vand.u32 %v208, 127
        %vm210 = vcmp.eq.s32.totalorder %v209, 5
        %v211 = vmul.f32 %v207, %v204
        %212 = vadd.xlane.f32.xlu0 %v211
        %v213 = vpop.xlane.xlu0 %212
        %v214 = vsel %vm210, %v213, %v204
        %s215 = scalar_lea.vmem [#allocation2], 6
        %v216 = vld [vmem:[%s215] ss:$0 sm:$0xff]
        %v217 = vxor.u32 %v216, 2147483648
        %v218 = vlaneseq
        %v219 = vand.u32 %v218, 127
        %vm220 = vcmp.eq.s32.totalorder %v219, 6
        %v221 = vmul.f32 %v217, %v214
        %222 = vadd.xlane.f32.xlu0 %v221
        %v223 = vpop.xlane.xlu0 %222
        %v224 = vsel %vm220, %v223, %v214
        %s225 = scalar_lea.vmem [#allocation2], 7
        %v226 = vld [vmem:[%s225] ss:$0 sm:$0xff]
        %v227 = vxor.u32 %v226, 2147483648
        %v228 = vlaneseq
        %v229 = vand.u32 %v228, 127
        %vm230 = vcmp.eq.s32.totalorder %v229, 7
        %v231 = vmul.f32 %v227, %v224
        %232 = vadd.xlane.f32.xlu0 %v231
        %v233 = vpop.xlane.xlu0 %232
        %v234 = vsel %vm230, %v233, %v224
        %s235 = scalar_lea.vmem [#allocation2], 8
        %v236 = vld [vmem:[%s235] ss:$0 sm:$0xff]
        %v237 = vxor.u32 %v236, 2147483648
        %v238 = vlaneseq
        %v239 = vand.u32 %v238, 127
        %vm240 = vcmp.eq.s32.totalorder %v239, 8
        %v241 = vmul.f32 %v237, %v234
        %242 = vadd.xlane.f32.xlu0 %v241
        %v243 = vpop.xlane.xlu0 %242
        %v244 = vsel %vm240, %v243, %v234
        %v245 = vmul.f32 %v237, %v164
        %246 = vadd.xlane.f32.xlu0 %v245
        %v247 = vpop.xlane.xlu0 %246
        %v248 = vsel %vm240, %v247, %v164
        %s249 = scalar_lea.vmem [#allocation2], 9
        %v250 = vld [vmem:[%s249] ss:$0 sm:$0xff]
        %v251 = vxor.u32 %v250, 2147483648
        %v252 = vlaneseq
        %v253 = vand.u32 %v252, 127
        %vm254 = vcmp.eq.s32.totalorder %v253, 9
        %v255 = vmul.f32 %v251, %v244
        %256 = vadd.xlane.f32.xlu0 %v255
        %v257 = vpop.xlane.xlu0 %256
        %v258 = vsel %vm254, %v257, %v244
        %v259 = vmul.f32 %v251, %v248
        %260 = vadd.xlane.f32.xlu0 %v259
        %v261 = vpop.xlane.xlu0 %260
        %v262 = vsel %vm254, %v261, %v248
        %v263 = vrcp.pop %v124
        %v264 = vmul.f32 %v258, %v263
        %vm265 = vweird.f32 %v124
        %v266 = vsel %vm265, %v258, %v264
        %267 = vst [vmem:[%s113] sm:$0xff] %v266
        %v268 = vrcp.pop %v140
        %v269 = vmul.f32 %v262, %v268
        %vm270 = vweird.f32 %v140
        %v271 = vsel %vm270, %v262, %v269
        %s272 = scalar_lea.vmem %s113, 8 [#allocation1]
        %273 = vst [vmem:[%s272] sm:$0xff] %v271
        %s274 = sand.u32 %s8, 1
        %s275 = sand.u32 %s8, 1
        %s276 = smul.addr %s275, 16
        %s277 = scalar_lea.vmem [#allocation1], %s276
        %s278 = sadd.s32 %s17, %s16
        %s279 = smul.addr %s15, 2
        %s280 = sadd.s32 %s278, %s279
        %s281 = smul.addr %s14, 2
        %s282 = sadd.s32 %s280, %s281
        %s283 = smul.addr %s282, 8
        %s284 = scalar_lea.vmem %s1, %s283
        // Predicated region
        $region55: #{custom-call.10} parent=53 // pred_check
          _
        $region56: #{custom-call.10} parent=53 // pred_check_branch
          %286 = sbr.rel (0) target = $region58
        $region57: #{custom-call.10} parent=53 // pred_region
          // Predicated region
          $region59: #{custom-call.10} parent=57 // pred_check
            _
          $region60: #{custom-call.10} parent=57 // pred_check_branch
            %288 = sbr.rel (0) target = $region62
          $region61: #{custom-call.10} parent=57 // pred_region
            // Predicated region
            $region74: #{custom-call.10} parent=61 // pred_check
              _
            $region75: #{custom-call.10} parent=61 // pred_check_branch
              %305 = sbr.rel (0) target = $region77
            $region76: #{custom-call.10} parent=61 // pred_region
              loop: start=0, step=1, limit=1
              $region78: #{custom-call.10} parent=76 // loop_pre_header
                _
              $region79: #{custom-call.10} parent=76 // loop_header
                %s307 = sphi 0, %s311
                %p308 = scmp.ge.s32.totalorder %s307, 1
                %s312 = sphi %s277, %s277
                %s313 = sphi %s284, %s284
              $region80: #{custom-call.10} parent=76 // loop_header_branch
                %310 = sbr.rel (%p308) target = $region84
              $region81: #{custom-call.10} parent=76 // loop_body
                %v314 = vld [vmem:[%s312] sm:$0xff]
                %315 = vst [vmem:[%s313] sm:$0xff] %v314
                %v316 = vld [vmem:[%s312 + $0x8] sm:$0xff]
                %317 = vst [vmem:[%s313 + $0x8] sm:$0xff] %v316
              $region82: #{custom-call.10} parent=76 // loop_footer
                %s311 = sadd.s32 1, %s307
              $region83: #{custom-call.10} parent=76 // loop_footer_branch
                %306 = sbr.rel target = $region79
              $region84: #{custom-call.10} parent=76 // loop_exit
                _
            $region77: #{custom-call.10} parent=61 // pred_fallthru
              _
            // Predicated region
            $region85: #{custom-call.10} parent=61 // pred_check
              _
            $region86: #{custom-call.10} parent=61 // pred_check_branch
              %319 = sbr.rel target = $region88
            $region87: #{custom-call.10} parent=61 // pred_region
              _
            $region88: #{custom-call.10} parent=61 // pred_fallthru
              _
          $region62: #{custom-call.10} parent=57 // pred_fallthru
            _
          // Predicated region
          $region63: #{custom-call.10} parent=57 // pred_check
            _
          $region64: #{custom-call.10} parent=57 // pred_check_branch
            %290 = sbr.rel target = $region66
          $region65: #{custom-call.10} parent=57 // pred_region
            loop: start=0, step=1, limit=1
            $region67: #{custom-call.10} parent=65 // loop_pre_header
              _
            $region68: #{custom-call.10} parent=65 // loop_header
              %s293 = sphi 0, %s297
              %p294 = scmp.ge.s32.totalorder %s293, 1
              %s298 = sphi %s277, %s277
              %s299 = sphi %s284, %s284
            $region69: #{custom-call.10} parent=65 // loop_header_branch
              %296 = sbr.rel (%p294) target = $region73
            $region70: #{custom-call.10} parent=65 // loop_body
              %v300 = vld [vmem:[%s298] sm:$0xff]
              %301 = vst [vmem:[%s299] sm:$0xff] %v300
              %v302 = vld [vmem:[%s298 + $0x8] sm:$0xff]
              %303 = vst [vmem:[%s299 + $0x8] sm:$0xff] %v302
            $region71: #{custom-call.10} parent=65 // loop_footer
              %s297 = sadd.s32 1, %s293
            $region72: #{custom-call.10} parent=65 // loop_footer_branch
              %292 = sbr.rel target = $region68
            $region73: #{custom-call.10} parent=65 // loop_exit
              _
          $region66: #{custom-call.10} parent=57 // pred_fallthru
            _
        $region58: #{custom-call.10} parent=53 // pred_fallthru
          _
        %320 = vnop
      $region54: #{custom-call.10} parent=5 // pred_fallthru
        _
      %p321 = scmp.le.s32.totalorder 2, %s3
      // Predicated region
      $region89: #{custom-call.10} parent=5 // pred_check
        %p322 = pneg %p321
      $region90: #{custom-call.10} parent=5 // pred_check_branch
        %324 = sbr.rel (%p322) target = $region92
      $region91: #{custom-call.10} parent=5 // pred_region
        %s325 = ssub.s32 %s3, 2
        %s326 = sand.u32 %s9, 1
        %s327 = sand.u32 %s9, 1
        %s328 = smul.addr %s327, 16
        %s329 = scalar_lea.vmem [#allocation1], %s328
      $region92: #{custom-call.10} parent=5 // pred_fallthru
        _
    $region6: #{custom-call.10} parent=1 // loop_footer
      %s7 = sadd.s32 1, %s3
    $region7: #{custom-call.10} parent=1 // loop_footer_branch
      %2 = sbr.rel target = $region3
    $region8: #{custom-call.10} parent=1 // loop_exit
      _

// kernel: custom-call.9
$region0: #{custom-call.9}
  %s0 = inlined_call_operand.vmem [shape: f32[16,1,10,10], index: 0, kind: input, shape index: {}]
  %s1 = inlined_call_operand.vmem [shape: f32[16,1,10,10], index: 1, kind: output, shape index: {}]
  $region1: #{custom-call.9} parent=0
    #allocation0 [shape = 'u8[16384]{0}', space=vmem, size = 0x4000, scoped, tag = 'operand span for operand 0']
    #allocation1 [shape = 'u8[16384]{0}', space=vmem, size = 0x4000, scoped, tag = 'operand span for operand 1']
    loop: start=0, step=1, limit=18
    $region2: #{custom-call.9} parent=1 // loop_pre_header
      _
    $region3: #{custom-call.9} parent=1 // loop_header
      %s3 = sphi 0, %s7
      %p4 = scmp.ge.s32.totalorder %s3, 18
      %s10 = sphi 0, %s36
      %s11 = sphi 0, %s32
      %s12 = sphi 0, %s28
      %s13 = sphi 0, %s24
      %s14 = sphi 0, %s10
      %s15 = sphi 0, %s11
      %s16 = sphi 0, %s12
      %s17 = sphi 0, %s13
      %s18 = sphi 0, %s14
      %s19 = sphi 0, %s15
      %s20 = sphi 0, %s16
      %s21 = sphi 0, %s17
    $region4: #{custom-call.9} parent=1 // loop_header_branch
      %6 = sbr.rel (%p4) target = $region8
    $region5: #{custom-call.9} parent=1 // loop_body
      %s8 = ssub.s32 %s3, 1
      %s9 = ssub.s32 %s3, 2
      %s22 = sadd.s32 1, %s13
      %p23 = scmp.ge.s32.totalorder %s22, 1
      %s24 = scalar_select %p23, 0, %s22
      %s25 = sadd.s32 1, %s12
      %s26 = scalar_select %p23, %s25, %s12
      %p27 = scmp.ge.s32.totalorder %s26, 1
      %s28 = scalar_select %p27, 0, %s26
      %s29 = sadd.s32 1, %s11
      %s30 = scalar_select %p27, %s29, %s11
      %p31 = scmp.ge.s32.totalorder %s30, 1
      %s32 = scalar_select %p31, 0, %s30
      %s33 = sadd.s32 1, %s10
      %s34 = scalar_select %p31, %s33, %s10
      %p35 = scmp.ge.s32.totalorder %s34, 16
      %s36 = scalar_select %p35, 0, %s34
      %p37 = scmp.le.s32.totalorder 1, %s3
      %p38 = scmp.lt.s32.totalorder %s3, 17
      %p39 = pnand %p37, %p38
      %p40 = pneg %p39
      // Predicated region
      $region9: #{custom-call.9} parent=5 // pred_check
        _
      $region10: #{custom-call.9} parent=5 // pred_check_branch
        %42 = sbr.rel (%p39) target = $region12
      $region11: #{custom-call.9} parent=5 // pred_region
        %s43 = ssub.s32 %s3, 1
      $region12: #{custom-call.9} parent=5 // pred_fallthru
        _
      %p44 = scmp.lt.s32.totalorder %s3, 16
      // Predicated region
      $region13: #{custom-call.9} parent=5 // pred_check
        %p45 = pneg %p44
      $region14: #{custom-call.9} parent=5 // pred_check_branch
        %47 = sbr.rel (%p45) target = $region16
      $region15: #{custom-call.9} parent=5 // pred_region
        %s48 = sand.u32 %s3, 1
        %s49 = sand.u32 %s3, 1
        %s50 = smul.addr %s49, 16
        %s51 = scalar_lea.vmem [#allocation0], %s50
        %s52 = sadd.s32 %s13, %s12
        %s53 = smul.addr %s11, 2
        %s54 = sadd.s32 %s52, %s53
        %s55 = smul.addr %s10, 2
        %s56 = sadd.s32 %s54, %s55
        %s57 = smul.addr %s56, 8
        %s58 = scalar_lea.vmem %s0, %s57
        // Predicated region
        $region17: #{custom-call.9} parent=15 // pred_check
          _
        $region18: #{custom-call.9} parent=15 // pred_check_branch
          %60 = sbr.rel (0) target = $region20
        $region19: #{custom-call.9} parent=15 // pred_region
          // Predicated region
          $region21: #{custom-call.9} parent=19 // pred_check
            _
          $region22: #{custom-call.9} parent=19 // pred_check_branch
            %62 = sbr.rel (0) target = $region24
          $region23: #{custom-call.9} parent=19 // pred_region
            // Predicated region
            $region36: #{custom-call.9} parent=23 // pred_check
              _
            $region37: #{custom-call.9} parent=23 // pred_check_branch
              %79 = sbr.rel (0) target = $region39
            $region38: #{custom-call.9} parent=23 // pred_region
              loop: start=0, step=1, limit=1
              $region40: #{custom-call.9} parent=38 // loop_pre_header
                _
              $region41: #{custom-call.9} parent=38 // loop_header
                %s81 = sphi 0, %s85
                %p82 = scmp.ge.s32.totalorder %s81, 1
                %s86 = sphi %s58, %s58
                %s87 = sphi %s51, %s51
              $region42: #{custom-call.9} parent=38 // loop_header_branch
                %84 = sbr.rel (%p82) target = $region46
              $region43: #{custom-call.9} parent=38 // loop_body
                %v88 = vld [vmem:[%s86] sm:$0xff]
                %89 = vst [vmem:[%s87] sm:$0xff] %v88
                %v90 = vld [vmem:[%s86 + $0x8] sm:$0xff]
                %91 = vst [vmem:[%s87 + $0x8] sm:$0xff] %v90
              $region44: #{custom-call.9} parent=38 // loop_footer
                %s85 = sadd.s32 1, %s81
              $region45: #{custom-call.9} parent=38 // loop_footer_branch
                %80 = sbr.rel target = $region41
              $region46: #{custom-call.9} parent=38 // loop_exit
                _
            $region39: #{custom-call.9} parent=23 // pred_fallthru
              _
            // Predicated region
            $region47: #{custom-call.9} parent=23 // pred_check
              _
            $region48: #{custom-call.9} parent=23 // pred_check_branch
              %93 = sbr.rel target = $region50
            $region49: #{custom-call.9} parent=23 // pred_region
              _
            $region50: #{custom-call.9} parent=23 // pred_fallthru
              _
          $region24: #{custom-call.9} parent=19 // pred_fallthru
            _
          // Predicated region
          $region25: #{custom-call.9} parent=19 // pred_check
            _
          $region26: #{custom-call.9} parent=19 // pred_check_branch
            %64 = sbr.rel target = $region28
          $region27: #{custom-call.9} parent=19 // pred_region
            loop: start=0, step=1, limit=1
            $region29: #{custom-call.9} parent=27 // loop_pre_header
              _
            $region30: #{custom-call.9} parent=27 // loop_header
              %s67 = sphi 0, %s71
              %p68 = scmp.ge.s32.totalorder %s67, 1
              %s72 = sphi %s58, %s58
              %s73 = sphi %s51, %s51
            $region31: #{custom-call.9} parent=27 // loop_header_branch
              %70 = sbr.rel (%p68) target = $region35
            $region32: #{custom-call.9} parent=27 // loop_body
              %v74 = vld [vmem:[%s72] sm:$0xff]
              %75 = vst [vmem:[%s73] sm:$0xff] %v74
              %v76 = vld [vmem:[%s72 + $0x8] sm:$0xff]
              %77 = vst [vmem:[%s73 + $0x8] sm:$0xff] %v76
            $region33: #{custom-call.9} parent=27 // loop_footer
              %s71 = sadd.s32 1, %s67
            $region34: #{custom-call.9} parent=27 // loop_footer_branch
              %66 = sbr.rel target = $region30
            $region35: #{custom-call.9} parent=27 // loop_exit
              _
          $region28: #{custom-call.9} parent=19 // pred_fallthru
            _
        $region20: #{custom-call.9} parent=15 // pred_fallthru
          _
        %94 = vnop
      $region16: #{custom-call.9} parent=5 // pred_fallthru
        _
      %p95 = scmp.le.s32.totalorder 1, %s3
      %p96 = scmp.lt.s32.totalorder %s3, 17
      %p97 = pnand %p95, %p96
      %p98 = pneg %p97
      // Predicated region
      $region51: #{custom-call.9} parent=5 // pred_check
        _
      $region52: #{custom-call.9} parent=5 // pred_check_branch
        %100 = sbr.rel (%p97) target = $region54
      $region53: #{custom-call.9} parent=5 // pred_region
        #allocation2 [shape = 'f32[10,10]{1,0}', space=vmem, size = 0x2000, scoped, tag = 'rescaled input a']
        %s101 = ssub.s32 %s3, 1
        %s102 = sand.u32 %s8, 1
        %s103 = sand.u32 %s8, 1
        %s104 = smul.addr %s103, 16
        %s105 = scalar_lea.vmem [#allocation0], %s104
        %s106 = sand.u32 %s8, 1
        %s107 = sand.u32 %s8, 1
        %s108 = smul.addr %s107, 16
        %s109 = scalar_lea.vmem [#allocation0], %s108
        %s110 = sand.u32 %s8, 1
        %s111 = sand.u32 %s8, 1
        %s112 = smul.addr %s111, 16
        %s113 = scalar_lea.vmem [#allocation1], %s112
        %v114 = vlaneseq
        %v115 = vand.u32 %v114, 127
        %vm116 = vcmp.lt.s32.totalorder %v115, 10
        %v117 = vlaneseq
        %v118 = vshrl.u32 %v117, 7
        %vm120 = vcmp.eq.s32.totalorder %v118, %v115
        %v121 = vld [vmem:[%s105] sm:$0xff]
        %v122 = vsel %vm120, %v121, 0.0
        %123 = vadd.xlane.f32.xlu0 %v122
        %v124 = vpop.xlane.xlu0 %123
        %vm125 = vcmp.le.s32.totalorder %v118, %v115
        %vm126 = vmand %vm125, %vm116
        %v127 = vsel %vm126, %v121, 0.0
        %v128 = vrcp.pop %v124
        %v129 = vmul.f32 %v127, %v128
        %130 = vst [vmem:[#allocation2] sm:$0xff] %v129
        %s131 = scalar_lea.vmem %s105, 8 [#allocation0]
        %s132 = scalar_lea.vmem [#allocation2], 8
        %v133 = vlaneseq
        %v134 = vshrl.u32 %v133, 7
        %v135 = vadd.s32 %v134, 8
        %vm136 = vcmp.eq.s32.totalorder %v135, %v115
        %v137 = vld [vmem:[%s131] sm:$0xff]
        %v138 = vsel %vm136, %v137, 0.0
        %139 = vadd.xlane.f32.xlu0 %v138
        %v140 = vpop.xlane.xlu0 %139
        %vm141 = vcmp.le.s32.totalorder %v135, %v115
        %vm142 = vmand %vm141, %vm116
        %v143 = vsel %vm142, %v137, 0.0
        %v144 = vrcp.pop %v140
        %v145 = vmul.f32 %v143, %v144
        %146 = vst [vmem:[%s132] sm:$0xff] %v145
        %v147 = vlaneseq
        %v148 = vand.u32 %v147, 127
        %v149 = vlaneseq
        %v150 = vshrl.u32 %v149, 7
        %vm152 = vcmp.eq.s32.totalorder %v148, %v150
        %v153 = vsel %vm152, -1.0, 0.0
        %v154 = vlaneseq
        %v155 = vand.u32 %v154, 127
        %v156 = vlaneseq
        %v157 = vshrl.u32 %v156, 7
        %v158 = vadd.s32 %v157, 8
        %vm159 = vcmp.eq.s32.totalorder %v155, %v158
        %v160 = vlaneseq
        %v161 = vand.u32 %v160, 127
        %vm162 = vcmp.eq.s32.totalorder %v161, 9
        %v163 = vsel %vm162, 1.0, -1.0
        %v164 = vsel %vm159, %v163, 0.0
        %s165 = scalar_lea.vmem [#allocation2], 8
        %v166 = vld [vmem:[%s165] ss:$0 sm:$0xff]
        %v167 = vxor.u32 %v166, 2147483648
        %v168 = vlaneseq
        %v169 = vand.u32 %v168, 127
        %vm170 = vcmp.eq.s32.totalorder %v169, 8
        %v171 = vmul.f32 %v167, %v164
        %172 = vadd.xlane.f32.xlu0 %v171
        %v173 = vpop.xlane.xlu0 %172
        %v174 = vsel %vm170, %v173, %v164
        %s175 = scalar_lea.vmem [#allocation2], 7
        %v176 = vld [vmem:[%s175] ss:$0 sm:$0xff]
        %v177 = vxor.u32 %v176, 2147483648
        %v178 = vlaneseq
        %v179 = vand.u32 %v178, 127
        %vm180 = vcmp.eq.s32.totalorder %v179, 7
        %v181 = vmul.f32 %v177, %v153
        %182 = vadd.xlane.f32.xlu0 %v181
        %v183 = vpop.xlane.xlu0 %182
        %v184 = vsel %vm180, %v183, %v153
        %v185 = vmul.f32 %v177, %v174
        %186 = vadd.xlane.f32.xlu0 %v185
        %v187 = vpop.xlane.xlu0 %186
        %v188 = vsel %vm180, %v187, %v174
        %s189 = scalar_lea.vmem [#allocation2], 6
        %v190 = vld [vmem:[%s189] ss:$0 sm:$0xff]
        %v191 = vxor.u32 %v190, 2147483648
        %v192 = vlaneseq
        %v193 = vand.u32 %v192, 127
        %vm194 = vcmp.eq.s32.totalorder %v193, 6
        %v195 = vmul.f32 %v191, %v184
        %196 = vadd.xlane.f32.xlu0 %v195
        %v197 = vpop.xlane.xlu0 %196
        %v198 = vsel %vm194, %v197, %v184
        %v199 = vmul.f32 %v191, %v188
        %200 = vadd.xlane.f32.xlu0 %v199
        %v201 = vpop.xlane.xlu0 %200
        %v202 = vsel %vm194, %v201, %v188
        %s203 = scalar_lea.vmem [#allocation2], 5
        %v204 = vld [vmem:[%s203] ss:$0 sm:$0xff]
        %v205 = vxor.u32 %v204, 2147483648
        %v206 = vlaneseq
        %v207 = vand.u32 %v206, 127
        %vm208 = vcmp.eq.s32.totalorder %v207, 5
        %v209 = vmul.f32 %v205, %v198
        %210 = vadd.xlane.f32.xlu0 %v209
        %v211 = vpop.xlane.xlu0 %210
        %v212 = vsel %vm208, %v211, %v198
        %v213 = vmul.f32 %v205, %v202
        %214 = vadd.xlane.f32.xlu0 %v213
        %v215 = vpop.xlane.xlu0 %214
        %v216 = vsel %vm208, %v215, %v202
        %s217 = scalar_lea.vmem [#allocation2], 4
        %v218 = vld [vmem:[%s217] ss:$0 sm:$0xff]
        %v219 = vxor.u32 %v218, 2147483648
        %v220 = vlaneseq
        %v221 = vand.u32 %v220, 127
        %vm222 = vcmp.eq.s32.totalorder %v221, 4
        %v223 = vmul.f32 %v219, %v212
        %224 = vadd.xlane.f32.xlu0 %v223
        %v225 = vpop.xlane.xlu0 %224
        %v226 = vsel %vm222, %v225, %v212
        %v227 = vmul.f32 %v219, %v216
        %228 = vadd.xlane.f32.xlu0 %v227
        %v229 = vpop.xlane.xlu0 %228
        %v230 = vsel %vm222, %v229, %v216
        %s231 = scalar_lea.vmem [#allocation2], 3
        %v232 = vld [vmem:[%s231] ss:$0 sm:$0xff]
        %v233 = vxor.u32 %v232, 2147483648
        %v234 = vlaneseq
        %v235 = vand.u32 %v234, 127
        %vm236 = vcmp.eq.s32.totalorder %v235, 3
        %v237 = vmul.f32 %v233, %v226
        %238 = vadd.xlane.f32.xlu0 %v237
        %v239 = vpop.xlane.xlu0 %238
        %v240 = vsel %vm236, %v239, %v226
        %v241 = vmul.f32 %v233, %v230
        %242 = vadd.xlane.f32.xlu0 %v241
        %v243 = vpop.xlane.xlu0 %242
        %v244 = vsel %vm236, %v243, %v230
        %s245 = scalar_lea.vmem [#allocation2], 2
        %v246 = vld [vmem:[%s245] ss:$0 sm:$0xff]
        %v247 = vxor.u32 %v246, 2147483648
        %v248 = vlaneseq
        %v249 = vand.u32 %v248, 127
        %vm250 = vcmp.eq.s32.totalorder %v249, 2
        %v251 = vmul.f32 %v247, %v240
        %252 = vadd.xlane.f32.xlu0 %v251
        %v253 = vpop.xlane.xlu0 %252
        %v254 = vsel %vm250, %v253, %v240
        %v255 = vmul.f32 %v247, %v244
        %256 = vadd.xlane.f32.xlu0 %v255
        %v257 = vpop.xlane.xlu0 %256
        %v258 = vsel %vm250, %v257, %v244
        %s259 = scalar_lea.vmem [#allocation2], 1
        %v260 = vld [vmem:[%s259] ss:$0 sm:$0xff]
        %v261 = vxor.u32 %v260, 2147483648
        %v262 = vlaneseq
        %v263 = vand.u32 %v262, 127
        %vm264 = vcmp.eq.s32.totalorder %v263, 1
        %v265 = vmul.f32 %v261, %v254
        %266 = vadd.xlane.f32.xlu0 %v265
        %v267 = vpop.xlane.xlu0 %266
        %v268 = vsel %vm264, %v267, %v254
        %v269 = vmul.f32 %v261, %v258
        %270 = vadd.xlane.f32.xlu0 %v269
        %v271 = vpop.xlane.xlu0 %270
        %v272 = vsel %vm264, %v271, %v258
        %v273 = vld [vmem:[#allocation2] ss:$0 sm:$0xff]
        %v274 = vxor.u32 %v273, 2147483648
        %v275 = vlaneseq
        %v276 = vand.u32 %v275, 127
        %vm277 = vcmp.eq.s32.totalorder %v276, 0
        %v278 = vmul.f32 %v274, %v268
        %279 = vadd.xlane.f32.xlu0 %v278
        %v280 = vpop.xlane.xlu0 %279
        %v281 = vsel %vm277, %v280, %v268
        %v282 = vmul.f32 %v274, %v272
        %283 = vadd.xlane.f32.xlu0 %v282
        %v284 = vpop.xlane.xlu0 %283
        %v285 = vsel %vm277, %v284, %v272
        %v286 = vrcp.pop %v124
        %v287 = vmul.f32 %v281, %v286
        %vm288 = vweird.f32 %v124
        %v289 = vsel %vm288, %v281, %v287
        %290 = vst [vmem:[%s113] sm:$0xff] %v289
        %v291 = vrcp.pop %v140
        %v292 = vmul.f32 %v285, %v291
        %vm293 = vweird.f32 %v140
        %v294 = vsel %vm293, %v285, %v292
        %s295 = scalar_lea.vmem %s113, 8 [#allocation1]
        %296 = vst [vmem:[%s295] sm:$0xff] %v294
        %s297 = sand.u32 %s8, 1
        %s298 = sand.u32 %s8, 1
        %s299 = smul.addr %s298, 16
        %s300 = scalar_lea.vmem [#allocation1], %s299
        %s301 = sadd.s32 %s17, %s16
        %s302 = smul.addr %s15, 2
        %s303 = sadd.s32 %s301, %s302
        %s304 = smul.addr %s14, 2
        %s305 = sadd.s32 %s303, %s304
        %s306 = smul.addr %s305, 8
        %s307 = scalar_lea.vmem %s1, %s306
        // Predicated region
        $region55: #{custom-call.9} parent=53 // pred_check
          _
        $region56: #{custom-call.9} parent=53 // pred_check_branch
          %309 = sbr.rel (0) target = $region58
        $region57: #{custom-call.9} parent=53 // pred_region
          // Predicated region
          $region59: #{custom-call.9} parent=57 // pred_check
            _
          $region60: #{custom-call.9} parent=57 // pred_check_branch
            %311 = sbr.rel (0) target = $region62
          $region61: #{custom-call.9} parent=57 // pred_region
            // Predicated region
            $region74: #{custom-call.9} parent=61 // pred_check
              _
            $region75: #{custom-call.9} parent=61 // pred_check_branch
              %328 = sbr.rel (0) target = $region77
            $region76: #{custom-call.9} parent=61 // pred_region
              loop: start=0, step=1, limit=1
              $region78: #{custom-call.9} parent=76 // loop_pre_header
                _
              $region79: #{custom-call.9} parent=76 // loop_header
                %s330 = sphi 0, %s334
                %p331 = scmp.ge.s32.totalorder %s330, 1
                %s335 = sphi %s300, %s300
                %s336 = sphi %s307, %s307
              $region80: #{custom-call.9} parent=76 // loop_header_branch
                %333 = sbr.rel (%p331) target = $region84
              $region81: #{custom-call.9} parent=76 // loop_body
                %v337 = vld [vmem:[%s335] sm:$0xff]
                %338 = vst [vmem:[%s336] sm:$0xff] %v337
                %v339 = vld [vmem:[%s335 + $0x8] sm:$0xff]
                %340 = vst [vmem:[%s336 + $0x8] sm:$0xff] %v339
              $region82: #{custom-call.9} parent=76 // loop_footer
                %s334 = sadd.s32 1, %s330
              $region83: #{custom-call.9} parent=76 // loop_footer_branch
                %329 = sbr.rel target = $region79
              $region84: #{custom-call.9} parent=76 // loop_exit
                _
            $region77: #{custom-call.9} parent=61 // pred_fallthru
              _
            // Predicated region
            $region85: #{custom-call.9} parent=61 // pred_check
              _
            $region86: #{custom-call.9} parent=61 // pred_check_branch
              %342 = sbr.rel target = $region88
            $region87: #{custom-call.9} parent=61 // pred_region
              _
            $region88: #{custom-call.9} parent=61 // pred_fallthru
              _
          $region62: #{custom-call.9} parent=57 // pred_fallthru
            _
          // Predicated region
          $region63: #{custom-call.9} parent=57 // pred_check
            _
          $region64: #{custom-call.9} parent=57 // pred_check_branch
            %313 = sbr.rel target = $region66
          $region65: #{custom-call.9} parent=57 // pred_region
            loop: start=0, step=1, limit=1
            $region67: #{custom-call.9} parent=65 // loop_pre_header
              _
            $region68: #{custom-call.9} parent=65 // loop_header
              %s316 = sphi 0, %s320
              %p317 = scmp.ge.s32.totalorder %s316, 1
              %s321 = sphi %s300, %s300
              %s322 = sphi %s307, %s307
            $region69: #{custom-call.9} parent=65 // loop_header_branch
              %319 = sbr.rel (%p317) target = $region73
            $region70: #{custom-call.9} parent=65 // loop_body
              %v323 = vld [vmem:[%s321] sm:$0xff]
              %324 = vst [vmem:[%s322] sm:$0xff] %v323
              %v325 = vld [vmem:[%s321 + $0x8] sm:$0xff]
              %326 = vst [vmem:[%s322 + $0x8] sm:$0xff] %v325
            $region71: #{custom-call.9} parent=65 // loop_footer
              %s320 = sadd.s32 1, %s316
            $region72: #{custom-call.9} parent=65 // loop_footer_branch
              %315 = sbr.rel target = $region68
            $region73: #{custom-call.9} parent=65 // loop_exit
              _
          $region66: #{custom-call.9} parent=57 // pred_fallthru
            _
        $region58: #{custom-call.9} parent=53 // pred_fallthru
          _
        %343 = vnop
      $region54: #{custom-call.9} parent=5 // pred_fallthru
        _
      %p344 = scmp.le.s32.totalorder 2, %s3
      // Predicated region
      $region89: #{custom-call.9} parent=5 // pred_check
        %p345 = pneg %p344
      $region90: #{custom-call.9} parent=5 // pred_check_branch
        %347 = sbr.rel (%p345) target = $region92
      $region91: #{custom-call.9} parent=5 // pred_region
        %s348 = ssub.s32 %s3, 2
        %s349 = sand.u32 %s9, 1
        %s350 = sand.u32 %s9, 1
        %s351 = smul.addr %s350, 16
        %s352 = scalar_lea.vmem [#allocation1], %s351
      $region92: #{custom-call.9} parent=5 // pred_fallthru
        _
    $region6: #{custom-call.9} parent=1 // loop_footer
      %s7 = sadd.s32 1, %s3
    $region7: #{custom-call.9} parent=1 // loop_footer_branch
      %2 = sbr.rel target = $region3
    $region8: #{custom-call.9} parent=1 // loop_exit
      _

</llo_original>
